<compile_context>
chip_gen: v5e
topology: v5e:2x2
jax: 0.10.0
libtpu: 0.0.40
codegen_flags: <defaults>
</compile_context>

<pallas_src>
import math
import jax
import jax.numpy as jnp
from jax.experimental import pallas as pl
from jax.experimental.pallas import tpu as pltpu

FEATURE_SIZE = 4
D_MODEL = 64
NHEAD = 4
HEAD_DIM = D_MODEL // NHEAD
NUM_LAYERS = 2
DIM_FF = 128
FORECAST_HORIZON = 1
OUT_FEATURES = FORECAST_HORIZON * FEATURE_SIZE
LN_EPS = 1e-5

# ---------------------------------------------------------------------------
# Single parameter-slab layout (one DMA for every weight/bias/LN vector + PE).
# Slab width = 3*D_MODEL = 192 so the fused (Wq|Wk|Wv) block fits un-split.
# All matrix blocks start at sublane-aligned (multiple-of-8) row offsets.
# ---------------------------------------------------------------------------
SLAB_W = 3 * D_MODEL                                        # 192

W_IN_OFF = 0                                                # (F, D) in rows [0,4)
LAYER_W_BASE = 8
WQKV_REL = 0                                                # (D, 3D)
WO_REL = D_MODEL                                            # (D, D)
W1_REL = 2 * D_MODEL                                        # (D, FF)
W2_REL = 3 * D_MODEL                                        # (FF, D)
LAYER_W_ROWS = 3 * D_MODEL + DIM_FF                         # 320
W_OUT_OFF = LAYER_W_BASE + NUM_LAYERS * LAYER_W_ROWS        # 648 (D, OUT)

VEC_BASE = W_OUT_OFF + D_MODEL                              # 712
B_IN_ROW = VEC_BASE                                         # 712
LAYER_V_BASE = VEC_BASE + 1                                 # 713
(BQKV_REL, BO_REL, LN1W_REL, LN1B_REL,
 B1_REL, B2_REL, LN2W_REL, LN2B_REL) = range(8)
LAYER_V_ROWS = 8
B_OUT_ROW = LAYER_V_BASE + NUM_LAYERS * LAYER_V_ROWS        # 729
PE_OFF = ((B_OUT_ROW + 1 + 7) // 8) * 8                     # 736 (aligned)


# ---------------------------------------------------------------------------
# Kernel
# ---------------------------------------------------------------------------
def _layer_norm(x, gamma, beta):
    mean = jnp.mean(x, axis=-1, keepdims=True)
    var = jnp.mean(jnp.square(x - mean), axis=-1, keepdims=True)
    return (x - mean) * jax.lax.rsqrt(var + LN_EPS) * gamma + beta


def _make_kernel(batch, seq):
    bs = batch * seq
    d = D_MODEL
    hd = HEAD_DIM
    scale = 1.0 / math.sqrt(hd)

    def kernel(src_ref, p_ref, out_ref):
        # ---- input projection (single K=4 MXU matmul) + positional enc ----
        w_in = p_ref[pl.ds(W_IN_OFF, FEATURE_SIZE), pl.ds(0, d)]
        b_in = p_ref[pl.ds(B_IN_ROW, 1), pl.ds(0, d)]
        x = jnp.dot(src_ref[...], w_in, preferred_element_type=jnp.float32) + b_in
        pe = p_ref[pl.ds(PE_OFF, seq), pl.ds(0, d)]
        x = (x.reshape(batch, seq, d) + pe[None, :, :]).reshape(bs, d)

        # ---- transformer encoder layers (post-LN, ReLU FFN) ----
        for l in range(NUM_LAYERS):
            wb = LAYER_W_BASE + l * LAYER_W_ROWS
            vb = LAYER_V_BASE + l * LAYER_V_ROWS

            # fused QKV: one (64,192) MXU matmul + one broadcast bias add
            wqkv = p_ref[pl.ds(wb + WQKV_REL, d), pl.ds(0, 3 * d)]
            bqkv = p_ref[pl.ds(vb + BQKV_REL, 1), pl.ds(0, 3 * d)]
            qkv = jnp.dot(x, wqkv, preferred_element_type=jnp.float32) + bqkv
            q3 = qkv[:, 0:d].reshape(batch, seq, d)
            k3 = qkv[:, d:2 * d].reshape(batch, seq, d)
            v3 = qkv[:, 2 * d:3 * d].reshape(batch, seq, d)

            # Per-head attention, batched over the batch dim (3-D einsums,
            # guaranteed Mosaic lowering; lane-offset slices go to XLU slots).
            ctx_heads = []
            for h in range(NHEAD):
                sl = slice(h * hd, (h + 1) * hd)
                qh, kh, vh = q3[:, :, sl], k3[:, :, sl], v3[:, :, sl]
                s = jnp.einsum('bqd,bkd->bqk', qh, kh,
                               preferred_element_type=jnp.float32) * scale
                s = s - jnp.max(s, axis=-1, keepdims=True)
                p = jnp.exp(s)
                p = p / jnp.sum(p, axis=-1, keepdims=True)   # exact (parity)
                ctx_heads.append(
                    jnp.einsum('bqk,bkd->bqd', p, vh,
                               preferred_element_type=jnp.float32))
            ctx = jnp.concatenate(ctx_heads, axis=-1).reshape(bs, d)

            # single K=64 output projection + residual + LN1
            wo = p_ref[pl.ds(wb + WO_REL, d), pl.ds(0, d)]
            bo = p_ref[pl.ds(vb + BO_REL, 1), pl.ds(0, d)]
            attn = jnp.dot(ctx, wo, preferred_element_type=jnp.float32) + bo
            ln1w = p_ref[pl.ds(vb + LN1W_REL, 1), pl.ds(0, d)]
            ln1b = p_ref[pl.ds(vb + LN1B_REL, 1), pl.ds(0, d)]
            x = _layer_norm(x + attn, ln1w, ln1b)

            # feed-forward (ReLU) + residual + LN2
            w1 = p_ref[pl.ds(wb + W1_REL, d), pl.ds(0, DIM_FF)]
            b1 = p_ref[pl.ds(vb + B1_REL, 1), pl.ds(0, DIM_FF)]
            h1 = jnp.maximum(
                jnp.dot(x, w1, preferred_element_type=jnp.float32) + b1, 0.0)
            w2 = p_ref[pl.ds(wb + W2_REL, DIM_FF), pl.ds(0, d)]
            b2 = p_ref[pl.ds(vb + B2_REL, 1), pl.ds(0, d)]
            ff = jnp.dot(h1, w2, preferred_element_type=jnp.float32) + b2
            ln2w = p_ref[pl.ds(vb + LN2W_REL, 1), pl.ds(0, d)]
            ln2b = p_ref[pl.ds(vb + LN2B_REL, 1), pl.ds(0, d)]
            x = _layer_norm(x + ff, ln2w, ln2b)

        # ---- head: last time step of each sequence ----
        summary = x.reshape(batch, seq, d)[:, seq - 1, :]                # (B, D)
        w_out = p_ref[pl.ds(W_OUT_OFF, d), pl.ds(0, OUT_FEATURES)]
        b_out = p_ref[pl.ds(B_OUT_ROW, 1), pl.ds(0, OUT_FEATURES)]
        out_ref[...] = (jnp.dot(summary, w_out,
                                preferred_element_type=jnp.float32) + b_out)

    return kernel


# ---------------------------------------------------------------------------
# Wrapper
# ---------------------------------------------------------------------------
_VMEM = pl.BlockSpec(memory_space=pltpu.MemorySpace.VMEM)


def weather_transformer_forward(src, param_slab):
    B, S, F = src.shape
    bs = B * S

    flops = 2 * bs * F * D_MODEL + 2 * B * D_MODEL * OUT_FEATURES
    flops += NUM_LAYERS * (2 * bs * D_MODEL * (3 * D_MODEL)      # fused QKV
                           + 2 * bs * D_MODEL * D_MODEL          # out proj
                           + 4 * B * NHEAD * S * S * HEAD_DIM    # scores + ctx
                           + 4 * bs * D_MODEL * DIM_FF)          # FFN
    transc = NUM_LAYERS * B * NHEAD * S * S + 4 * NUM_LAYERS * bs
    bytes_accessed = 4 * (src.size + param_slab.size + B * OUT_FEATURES)

    out = pl.pallas_call(
        _make_kernel(B, S),
        out_shape=jax.ShapeDtypeStruct((B, OUT_FEATURES), jnp.float32),
        in_specs=[_VMEM, _VMEM],
        out_specs=_VMEM,
        cost_estimate=pl.CostEstimate(flops=flops, transcendentals=transc,
                                      bytes_accessed=bytes_accessed),
    )(src.reshape(bs, F), param_slab)
    return out.reshape(B, OUT_FEATURES // F, F)       # (B, forecast_horizon, F)


# ---------------------------------------------------------------------------
# Positional encoding, parameter init (deterministic), and slab packing.
# ---------------------------------------------------------------------------
def positional_encoding(seq_len, d_model):
    position = jnp.arange(seq_len, dtype=jnp.float32)[:, None]
    div_term = jnp.exp(jnp.arange(0, d_model, 2, dtype=jnp.float32)
                       * (-math.log(10000.0) / d_model))
    pe = jnp.zeros((seq_len, d_model), jnp.float32)
    pe = pe.at[:, 0::2].set(jnp.sin(position * div_term))
    pe = pe.at[:, 1::2].set(jnp.cos(position * div_term))
    return pe


def _uniform(key, shape, fan_in):
    bound = 1.0 / math.sqrt(fan_in)
    return jax.random.uniform(key, shape, jnp.float32, -bound, bound)


def init_params(key):
    keys = iter(jax.random.split(key, 64))

    def u(shape, fan_in):
        return _uniform(next(keys), shape, fan_in)

    L = NUM_LAYERS
    return {
        "w_in": u((FEATURE_SIZE, D_MODEL), FEATURE_SIZE),
        "b_in": u((1, D_MODEL), FEATURE_SIZE),
        "w_out": u((D_MODEL, OUT_FEATURES), D_MODEL),
        "b_out": u((1, OUT_FEATURES), D_MODEL),
        "wq": u((L, D_MODEL, D_MODEL), D_MODEL),
        "wk": u((L, D_MODEL, D_MODEL), D_MODEL),
        "wv": u((L, D_MODEL, D_MODEL), D_MODEL),
        "bq": jnp.zeros((L, 1, D_MODEL), jnp.float32),
        "bk": jnp.zeros((L, 1, D_MODEL), jnp.float32),
        "bv": jnp.zeros((L, 1, D_MODEL), jnp.float32),
        "wo": u((L, D_MODEL, D_MODEL), D_MODEL),
        "bo": jnp.zeros((L, 1, D_MODEL), jnp.float32),
        "ln1w": jnp.ones((L, 1, D_MODEL), jnp.float32),
        "ln1b": jnp.zeros((L, 1, D_MODEL), jnp.float32),
        "ln2w": jnp.ones((L, 1, D_MODEL), jnp.float32),
        "ln2b": jnp.zeros((L, 1, D_MODEL), jnp.float32),
        "w1": u((L, D_MODEL, DIM_FF), D_MODEL),
        "b1": u((L, 1, DIM_FF), D_MODEL),
        "w2": u((L, DIM_FF, D_MODEL), DIM_FF),
        "b2": u((L, 1, D_MODEL), DIM_FF),
    }


def pack_params(params, seq_len):
    """Pack every weight, bias, LN vector and the PE table into ONE f32 slab."""
    entries = [(W_IN_OFF, params["w_in"]),
               (B_IN_ROW, params["b_in"]),
               (W_OUT_OFF, params["w_out"]),
               (B_OUT_ROW, params["b_out"]),
               (PE_OFF, positional_encoding(seq_len, D_MODEL))]
    for l in range(NUM_LAYERS):
        wb = LAYER_W_BASE + l * LAYER_W_ROWS
        vb = LAYER_V_BASE + l * LAYER_V_ROWS
        wqkv = jnp.concatenate(
            [params["wq"][l], params["wk"][l], params["wv"][l]], axis=1)
        bqkv = jnp.concatenate(
            [params["bq"][l], params["bk"][l], params["bv"][l]], axis=1)
        entries += [(wb + WQKV_REL, wqkv),
                    (wb + WO_REL, params["wo"][l]),
                    (wb + W1_REL, params["w1"][l]),
                    (wb + W2_REL, params["w2"][l]),
                    (vb + BQKV_REL, bqkv),
                    (vb + BO_REL, params["bo"][l]),
                    (vb + LN1W_REL, params["ln1w"][l]),
                    (vb + LN1B_REL, params["ln1b"][l]),
                    (vb + B1_REL, params["b1"][l]),
                    (vb + B2_REL, params["b2"][l]),
                    (vb + LN2W_REL, params["ln2w"][l]),
                    (vb + LN2B_REL, params["ln2b"][l])]

    slab = jnp.zeros((PE_OFF + seq_len, SLAB_W), jnp.float32)
    for row, arr in entries:
        arr = jnp.asarray(arr, jnp.float32)
        slab = slab.at[row:row + arr.shape[0], :arr.shape[1]].set(arr)
    return slab


if __name__ == "__main__":
    key = jax.random.PRNGKey(0)
    pkey, xkey = jax.random.split(key)
    params = init_params(pkey)

    batch, seq = 2, 8
    src = jax.random.normal(xkey, (batch, seq, FEATURE_SIZE), jnp.float32)
    param_slab = pack_params(params, seq)

    out = jax.jit(weather_transformer_forward)(src, param_slab)
    out = jax.block_until_ready(out)

    assert out.shape == (batch, FORECAST_HORIZON, FEATURE_SIZE), out.shape
    assert bool(jnp.all(jnp.isfinite(out)))
    print("KERNEL_OK")
</pallas_src>

<mosaic_0001>
module attributes {stable_mosaic.version = 11 : i64} {
  func.func @kernel(%arg0: memref<16x4xf32, #tpu.memory_space<vmem>>, %arg1: memref<744x192xf32, #tpu.memory_space<vmem>>, %arg2: memref<2x4xf32, #tpu.memory_space<vmem>>) attributes {dimension_semantics = [], scalar_prefetch = 0 : i64, scratch_operands = 0 : i64, tpu.core_type = #tpu.core_type<tc>} {
    %c0 = arith.constant 0 : index
    %c0_0 = arith.constant 0 : index
    %0 = vector.load %arg1[%c0, %c0_0] : memref<744x192xf32, #tpu.memory_space<vmem>>, vector<4x64xf32>
    %c712 = arith.constant 712 : index
    %c0_1 = arith.constant 0 : index
    %1 = vector.load %arg1[%c712, %c0_1] : memref<744x192xf32, #tpu.memory_space<vmem>>, vector<1x64xf32>
    %c0_2 = arith.constant 0 : index
    %c0_3 = arith.constant 0 : index
    %2 = vector.load %arg0[%c0_2, %c0_3] : memref<16x4xf32, #tpu.memory_space<vmem>>, vector<16x4xf32>
    %cst = arith.constant dense<0.000000e+00> : vector<16x64xf32>
    %3 = tpu.matmul %2, %0, %cst {dimension_numbers = #tpu.dot_dimension_numbers<[1], [0], [0], [1], [0, 0, 1, 1], [], []>} : vector<16x4xf32>, vector<4x64xf32>, vector<16x64xf32> -> vector<16x64xf32>
    %4 = vector.broadcast %1 : vector<1x64xf32> to vector<16x64xf32>
    %5 = arith.addf %3, %4 : vector<16x64xf32>
    %c736 = arith.constant 736 : index
    %c0_4 = arith.constant 0 : index
    %6 = vector.load %arg1[%c736, %c0_4] : memref<744x192xf32, #tpu.memory_space<vmem>>, vector<8x64xf32>
    %7 = vector.shape_cast %5 : vector<16x64xf32> to vector<2x8x64xf32>
    %8 = vector.shape_cast %6 : vector<8x64xf32> to vector<1x8x64xf32>
    %9 = vector.broadcast %8 : vector<1x8x64xf32> to vector<2x8x64xf32>
    %10 = arith.addf %7, %9 : vector<2x8x64xf32>
    %11 = vector.shape_cast %10 : vector<2x8x64xf32> to vector<16x64xf32>
    %c8 = arith.constant 8 : index
    %c0_5 = arith.constant 0 : index
    %12 = vector.load %arg1[%c8, %c0_5] : memref<744x192xf32, #tpu.memory_space<vmem>>, vector<64x192xf32>
    %c713 = arith.constant 713 : index
    %c0_6 = arith.constant 0 : index
    %13 = vector.load %arg1[%c713, %c0_6] : memref<744x192xf32, #tpu.memory_space<vmem>>, vector<1x192xf32>
    %cst_7 = arith.constant dense<0.000000e+00> : vector<16x192xf32>
    %14 = tpu.matmul %11, %12, %cst_7 {dimension_numbers = #tpu.dot_dimension_numbers<[1], [0], [0], [1], [0, 0, 1, 1], [], []>} : vector<16x64xf32>, vector<64x192xf32>, vector<16x192xf32> -> vector<16x192xf32>
    %15 = vector.broadcast %13 : vector<1x192xf32> to vector<16x192xf32>
    %16 = arith.addf %14, %15 : vector<16x192xf32>
    %17 = vector.extract_strided_slice %16 {offsets = [0, 0], sizes = [16, 64], strides = [1, 1]} : vector<16x192xf32> to vector<16x64xf32>
    %18 = vector.shape_cast %17 : vector<16x64xf32> to vector<2x8x64xf32>
    %19 = vector.extract_strided_slice %16 {offsets = [0, 64], sizes = [16, 64], strides = [1, 1]} : vector<16x192xf32> to vector<16x64xf32>
    %20 = vector.shape_cast %19 : vector<16x64xf32> to vector<2x8x64xf32>
    %21 = vector.extract_strided_slice %16 {offsets = [0, 128], sizes = [16, 64], strides = [1, 1]} : vector<16x192xf32> to vector<16x64xf32>
    %22 = vector.shape_cast %21 : vector<16x64xf32> to vector<2x8x64xf32>
    %23 = vector.extract_strided_slice %18 {offsets = [0, 0, 0], sizes = [2, 8, 16], strides = [1, 1, 1]} : vector<2x8x64xf32> to vector<2x8x16xf32>
    %24 = vector.extract_strided_slice %20 {offsets = [0, 0, 0], sizes = [2, 8, 16], strides = [1, 1, 1]} : vector<2x8x64xf32> to vector<2x8x16xf32>
    %25 = vector.extract_strided_slice %22 {offsets = [0, 0, 0], sizes = [2, 8, 16], strides = [1, 1, 1]} : vector<2x8x64xf32> to vector<2x8x16xf32>
    "tpu.trace_start"() <{level = 10 : i32, message = "bqd,bkd->bqk"}> : () -> ()
    %cst_8 = arith.constant dense<0.000000e+00> : vector<2x8x8xf32>
    %26 = tpu.matmul %23, %24, %cst_8 {dimension_numbers = #tpu.dot_dimension_numbers<[2], [2], [1], [1], [0, 0, 0, 1, 1, 1], [0], [0]>} : vector<2x8x16xf32>, vector<2x8x16xf32>, vector<2x8x8xf32> -> vector<2x8x8xf32>
    "tpu.trace_stop"() : () -> ()
    %cst_9 = arith.constant 2.500000e-01 : f32
    %27 = vector.broadcast %cst_9 : f32 to vector<2x8x8xf32>
    %28 = arith.mulf %26, %27 : vector<2x8x8xf32>
    %cst_10 = arith.constant dense<0xFF800000> : vector<2x8xf32>
    %29 = vector.multi_reduction <maximumf>, %28, %cst_10 [2] : vector<2x8x8xf32> to vector<2x8xf32>
    %30 = vector.shape_cast %29 : vector<2x8xf32> to vector<2x8x1xf32>
    %31 = vector.broadcast %30 : vector<2x8x1xf32> to vector<2x8x8xf32>
    %32 = arith.subf %28, %31 : vector<2x8x8xf32>
    %33 = math.exp %32 : vector<2x8x8xf32>
    %cst_11 = arith.constant dense<0.000000e+00> : vector<2x8xf32>
    %34 = vector.multi_reduction <add>, %33, %cst_11 [2] : vector<2x8x8xf32> to vector<2x8xf32>
    %35 = vector.shape_cast %34 : vector<2x8xf32> to vector<2x8x1xf32>
    %36 = vector.broadcast %35 : vector<2x8x1xf32> to vector<2x8x8xf32>
    %37 = arith.divf %33, %36 : vector<2x8x8xf32>
    "tpu.trace_start"() <{level = 10 : i32, message = "bqk,bkd->bqd"}> : () -> ()
    %cst_12 = arith.constant dense<0.000000e+00> : vector<2x8x16xf32>
    %38 = tpu.matmul %37, %25, %cst_12 {dimension_numbers = #tpu.dot_dimension_numbers<[2], [1], [1], [2], [0, 0, 0, 1, 1, 2], [0], [0]>} : vector<2x8x8xf32>, vector<2x8x16xf32>, vector<2x8x16xf32> -> vector<2x8x16xf32>
    "tpu.trace_stop"() : () -> ()
    %39 = vector.extract_strided_slice %18 {offsets = [0, 0, 16], sizes = [2, 8, 16], strides = [1, 1, 1]} : vector<2x8x64xf32> to vector<2x8x16xf32>
    %40 = vector.extract_strided_slice %20 {offsets = [0, 0, 16], sizes = [2, 8, 16], strides = [1, 1, 1]} : vector<2x8x64xf32> to vector<2x8x16xf32>
    %41 = vector.extract_strided_slice %22 {offsets = [0, 0, 16], sizes = [2, 8, 16], strides = [1, 1, 1]} : vector<2x8x64xf32> to vector<2x8x16xf32>
    "tpu.trace_start"() <{level = 10 : i32, message = "bqd,bkd->bqk"}> : () -> ()
    %cst_13 = arith.constant dense<0.000000e+00> : vector<2x8x8xf32>
    %42 = tpu.matmul %39, %40, %cst_13 {dimension_numbers = #tpu.dot_dimension_numbers<[2], [2], [1], [1], [0, 0, 0, 1, 1, 1], [0], [0]>} : vector<2x8x16xf32>, vector<2x8x16xf32>, vector<2x8x8xf32> -> vector<2x8x8xf32>
    "tpu.trace_stop"() : () -> ()
    %cst_14 = arith.constant 2.500000e-01 : f32
    %43 = vector.broadcast %cst_14 : f32 to vector<2x8x8xf32>
    %44 = arith.mulf %42, %43 : vector<2x8x8xf32>
    %cst_15 = arith.constant dense<0xFF800000> : vector<2x8xf32>
    %45 = vector.multi_reduction <maximumf>, %44, %cst_15 [2] : vector<2x8x8xf32> to vector<2x8xf32>
    %46 = vector.shape_cast %45 : vector<2x8xf32> to vector<2x8x1xf32>
    %47 = vector.broadcast %46 : vector<2x8x1xf32> to vector<2x8x8xf32>
    %48 = arith.subf %44, %47 : vector<2x8x8xf32>
    %49 = math.exp %48 : vector<2x8x8xf32>
    %cst_16 = arith.constant dense<0.000000e+00> : vector<2x8xf32>
    %50 = vector.multi_reduction <add>, %49, %cst_16 [2] : vector<2x8x8xf32> to vector<2x8xf32>
    %51 = vector.shape_cast %50 : vector<2x8xf32> to vector<2x8x1xf32>
    %52 = vector.broadcast %51 : vector<2x8x1xf32> to vector<2x8x8xf32>
    %53 = arith.divf %49, %52 : vector<2x8x8xf32>
    "tpu.trace_start"() <{level = 10 : i32, message = "bqk,bkd->bqd"}> : () -> ()
    %cst_17 = arith.constant dense<0.000000e+00> : vector<2x8x16xf32>
    %54 = tpu.matmul %53, %41, %cst_17 {dimension_numbers = #tpu.dot_dimension_numbers<[2], [1], [1], [2], [0, 0, 0, 1, 1, 2], [0], [0]>} : vector<2x8x8xf32>, vector<2x8x16xf32>, vector<2x8x16xf32> -> vector<2x8x16xf32>
    "tpu.trace_stop"() : () -> ()
    %55 = vector.extract_strided_slice %18 {offsets = [0, 0, 32], sizes = [2, 8, 16], strides = [1, 1, 1]} : vector<2x8x64xf32> to vector<2x8x16xf32>
    %56 = vector.extract_strided_slice %20 {offsets = [0, 0, 32], sizes = [2, 8, 16], strides = [1, 1, 1]} : vector<2x8x64xf32> to vector<2x8x16xf32>
    %57 = vector.extract_strided_slice %22 {offsets = [0, 0, 32], sizes = [2, 8, 16], strides = [1, 1, 1]} : vector<2x8x64xf32> to vector<2x8x16xf32>
    "tpu.trace_start"() <{level = 10 : i32, message = "bqd,bkd->bqk"}> : () -> ()
    %cst_18 = arith.constant dense<0.000000e+00> : vector<2x8x8xf32>
    %58 = tpu.matmul %55, %56, %cst_18 {dimension_numbers = #tpu.dot_dimension_numbers<[2], [2], [1], [1], [0, 0, 0, 1, 1, 1], [0], [0]>} : vector<2x8x16xf32>, vector<2x8x16xf32>, vector<2x8x8xf32> -> vector<2x8x8xf32>
    "tpu.trace_stop"() : () -> ()
    %cst_19 = arith.constant 2.500000e-01 : f32
    %59 = vector.broadcast %cst_19 : f32 to vector<2x8x8xf32>
    %60 = arith.mulf %58, %59 : vector<2x8x8xf32>
    %cst_20 = arith.constant dense<0xFF800000> : vector<2x8xf32>
    %61 = vector.multi_reduction <maximumf>, %60, %cst_20 [2] : vector<2x8x8xf32> to vector<2x8xf32>
    %62 = vector.shape_cast %61 : vector<2x8xf32> to vector<2x8x1xf32>
    %63 = vector.broadcast %62 : vector<2x8x1xf32> to vector<2x8x8xf32>
    %64 = arith.subf %60, %63 : vector<2x8x8xf32>
    %65 = math.exp %64 : vector<2x8x8xf32>
    %cst_21 = arith.constant dense<0.000000e+00> : vector<2x8xf32>
    %66 = vector.multi_reduction <add>, %65, %cst_21 [2] : vector<2x8x8xf32> to vector<2x8xf32>
    %67 = vector.shape_cast %66 : vector<2x8xf32> to vector<2x8x1xf32>
    %68 = vector.broadcast %67 : vector<2x8x1xf32> to vector<2x8x8xf32>
    %69 = arith.divf %65, %68 : vector<2x8x8xf32>
    "tpu.trace_start"() <{level = 10 : i32, message = "bqk,bkd->bqd"}> : () -> ()
    %cst_22 = arith.constant dense<0.000000e+00> : vector<2x8x16xf32>
    %70 = tpu.matmul %69, %57, %cst_22 {dimension_numbers = #tpu.dot_dimension_numbers<[2], [1], [1], [2], [0, 0, 0, 1, 1, 2], [0], [0]>} : vector<2x8x8xf32>, vector<2x8x16xf32>, vector<2x8x16xf32> -> vector<2x8x16xf32>
    "tpu.trace_stop"() : () -> ()
    %71 = vector.extract_strided_slice %18 {offsets = [0, 0, 48], sizes = [2, 8, 16], strides = [1, 1, 1]} : vector<2x8x64xf32> to vector<2x8x16xf32>
    %72 = vector.extract_strided_slice %20 {offsets = [0, 0, 48], sizes = [2, 8, 16], strides = [1, 1, 1]} : vector<2x8x64xf32> to vector<2x8x16xf32>
    %73 = vector.extract_strided_slice %22 {offsets = [0, 0, 48], sizes = [2, 8, 16], strides = [1, 1, 1]} : vector<2x8x64xf32> to vector<2x8x16xf32>
    "tpu.trace_start"() <{level = 10 : i32, message = "bqd,bkd->bqk"}> : () -> ()
    %cst_23 = arith.constant dense<0.000000e+00> : vector<2x8x8xf32>
    %74 = tpu.matmul %71, %72, %cst_23 {dimension_numbers = #tpu.dot_dimension_numbers<[2], [2], [1], [1], [0, 0, 0, 1, 1, 1], [0], [0]>} : vector<2x8x16xf32>, vector<2x8x16xf32>, vector<2x8x8xf32> -> vector<2x8x8xf32>
    "tpu.trace_stop"() : () -> ()
    %cst_24 = arith.constant 2.500000e-01 : f32
    %75 = vector.broadcast %cst_24 : f32 to vector<2x8x8xf32>
    %76 = arith.mulf %74, %75 : vector<2x8x8xf32>
    %cst_25 = arith.constant dense<0xFF800000> : vector<2x8xf32>
    %77 = vector.multi_reduction <maximumf>, %76, %cst_25 [2] : vector<2x8x8xf32> to vector<2x8xf32>
    %78 = vector.shape_cast %77 : vector<2x8xf32> to vector<2x8x1xf32>
    %79 = vector.broadcast %78 : vector<2x8x1xf32> to vector<2x8x8xf32>
    %80 = arith.subf %76, %79 : vector<2x8x8xf32>
    %81 = math.exp %80 : vector<2x8x8xf32>
    %cst_26 = arith.constant dense<0.000000e+00> : vector<2x8xf32>
    %82 = vector.multi_reduction <add>, %81, %cst_26 [2] : vector<2x8x8xf32> to vector<2x8xf32>
    %83 = vector.shape_cast %82 : vector<2x8xf32> to vector<2x8x1xf32>
    %84 = vector.broadcast %83 : vector<2x8x1xf32> to vector<2x8x8xf32>
    %85 = arith.divf %81, %84 : vector<2x8x8xf32>
    "tpu.trace_start"() <{level = 10 : i32, message = "bqk,bkd->bqd"}> : () -> ()
    %cst_27 = arith.constant dense<0.000000e+00> : vector<2x8x16xf32>
    %86 = tpu.matmul %85, %73, %cst_27 {dimension_numbers = #tpu.dot_dimension_numbers<[2], [1], [1], [2], [0, 0, 0, 1, 1, 2], [0], [0]>} : vector<2x8x8xf32>, vector<2x8x16xf32>, vector<2x8x16xf32> -> vector<2x8x16xf32>
    "tpu.trace_stop"() : () -> ()
    %87 = tpu.concatenate %38, %54, %70, %86 in 2 : vector<2x8x16xf32>, vector<2x8x16xf32>, vector<2x8x16xf32>, vector<2x8x16xf32> -> vector<2x8x64xf32>
    %88 = vector.shape_cast %87 : vector<2x8x64xf32> to vector<16x64xf32>
    %c72 = arith.constant 72 : index
    %c0_28 = arith.constant 0 : index
    %89 = vector.load %arg1[%c72, %c0_28] : memref<744x192xf32, #tpu.memory_space<vmem>>, vector<64x64xf32>
    %c714 = arith.constant 714 : index
    %c0_29 = arith.constant 0 : index
    %90 = vector.load %arg1[%c714, %c0_29] : memref<744x192xf32, #tpu.memory_space<vmem>>, vector<1x64xf32>
    %cst_30 = arith.constant dense<0.000000e+00> : vector<16x64xf32>
    %91 = tpu.matmul %88, %89, %cst_30 {dimension_numbers = #tpu.dot_dimension_numbers<[1], [0], [0], [1], [0, 0, 1, 1], [], []>} : vector<16x64xf32>, vector<64x64xf32>, vector<16x64xf32> -> vector<16x64xf32>
    %92 = vector.broadcast %90 : vector<1x64xf32> to vector<16x64xf32>
    %93 = arith.addf %91, %92 : vector<16x64xf32>
    %c715 = arith.constant 715 : index
    %c0_31 = arith.constant 0 : index
    %94 = vector.load %arg1[%c715, %c0_31] : memref<744x192xf32, #tpu.memory_space<vmem>>, vector<1x64xf32>
    %c716 = arith.constant 716 : index
    %c0_32 = arith.constant 0 : index
    %95 = vector.load %arg1[%c716, %c0_32] : memref<744x192xf32, #tpu.memory_space<vmem>>, vector<1x64xf32>
    %96 = arith.addf %11, %93 : vector<16x64xf32>
    %cst_33 = arith.constant dense<0.000000e+00> : vector<16xf32>
    %97 = vector.multi_reduction <add>, %96, %cst_33 [1] : vector<16x64xf32> to vector<16xf32>
    %98 = vector.shape_cast %97 : vector<16xf32> to vector<16x1xf32>
    %cst_34 = arith.constant 6.400000e+01 : f32
    %99 = vector.broadcast %cst_34 : f32 to vector<16x1xf32>
    %100 = arith.divf %98, %99 : vector<16x1xf32>
    %101 = vector.broadcast %100 : vector<16x1xf32> to vector<16x64xf32>
    %102 = arith.subf %96, %101 : vector<16x64xf32>
    %103 = arith.mulf %102, %102 : vector<16x64xf32>
    %cst_35 = arith.constant dense<0.000000e+00> : vector<16xf32>
    %104 = vector.multi_reduction <add>, %103, %cst_35 [1] : vector<16x64xf32> to vector<16xf32>
    %105 = vector.shape_cast %104 : vector<16xf32> to vector<16x1xf32>
    %cst_36 = arith.constant 6.400000e+01 : f32
    %106 = vector.broadcast %cst_36 : f32 to vector<16x1xf32>
    %107 = arith.divf %105, %106 : vector<16x1xf32>
    %108 = vector.broadcast %100 : vector<16x1xf32> to vector<16x64xf32>
    %109 = arith.subf %96, %108 : vector<16x64xf32>
    %cst_37 = arith.constant 9.99999974E-6 : f32
    %110 = vector.broadcast %cst_37 : f32 to vector<16x1xf32>
    %111 = arith.addf %107, %110 : vector<16x1xf32>
    %112 = math.rsqrt %111 : vector<16x1xf32>
    %113 = vector.broadcast %112 : vector<16x1xf32> to vector<16x64xf32>
    %114 = arith.mulf %109, %113 : vector<16x64xf32>
    %115 = vector.broadcast %94 : vector<1x64xf32> to vector<16x64xf32>
    %116 = arith.mulf %114, %115 : vector<16x64xf32>
    %117 = vector.broadcast %95 : vector<1x64xf32> to vector<16x64xf32>
    %118 = arith.addf %116, %117 : vector<16x64xf32>
    %c136 = arith.constant 136 : index
    %c0_38 = arith.constant 0 : index
    %119 = vector.load %arg1[%c136, %c0_38] : memref<744x192xf32, #tpu.memory_space<vmem>>, vector<64x128xf32>
    %c717 = arith.constant 717 : index
    %c0_39 = arith.constant 0 : index
    %120 = vector.load %arg1[%c717, %c0_39] : memref<744x192xf32, #tpu.memory_space<vmem>>, vector<1x128xf32>
    %cst_40 = arith.constant dense<0.000000e+00> : vector<16x128xf32>
    %121 = tpu.matmul %118, %119, %cst_40 {dimension_numbers = #tpu.dot_dimension_numbers<[1], [0], [0], [1], [0, 0, 1, 1], [], []>} : vector<16x64xf32>, vector<64x128xf32>, vector<16x128xf32> -> vector<16x128xf32>
    %122 = vector.broadcast %120 : vector<1x128xf32> to vector<16x128xf32>
    %123 = arith.addf %121, %122 : vector<16x128xf32>
    %cst_41 = arith.constant 0.000000e+00 : f32
    %124 = vector.broadcast %cst_41 : f32 to vector<16x128xf32>
    %125 = arith.maximumf %123, %124 : vector<16x128xf32>
    %c200 = arith.constant 200 : index
    %c0_42 = arith.constant 0 : index
    %126 = vector.load %arg1[%c200, %c0_42] : memref<744x192xf32, #tpu.memory_space<vmem>>, vector<128x64xf32>
    %c718 = arith.constant 718 : index
    %c0_43 = arith.constant 0 : index
    %127 = vector.load %arg1[%c718, %c0_43] : memref<744x192xf32, #tpu.memory_space<vmem>>, vector<1x64xf32>
    %cst_44 = arith.constant dense<0.000000e+00> : vector<16x64xf32>
    %128 = tpu.matmul %125, %126, %cst_44 {dimension_numbers = #tpu.dot_dimension_numbers<[1], [0], [0], [1], [0, 0, 1, 1], [], []>} : vector<16x128xf32>, vector<128x64xf32>, vector<16x64xf32> -> vector<16x64xf32>
    %129 = vector.broadcast %127 : vector<1x64xf32> to vector<16x64xf32>
    %130 = arith.addf %128, %129 : vector<16x64xf32>
    %c719 = arith.constant 719 : index
    %c0_45 = arith.constant 0 : index
    %131 = vector.load %arg1[%c719, %c0_45] : memref<744x192xf32, #tpu.memory_space<vmem>>, vector<1x64xf32>
    %c720 = arith.constant 720 : index
    %c0_46 = arith.constant 0 : index
    %132 = vector.load %arg1[%c720, %c0_46] : memref<744x192xf32, #tpu.memory_space<vmem>>, vector<1x64xf32>
    %133 = arith.addf %118, %130 : vector<16x64xf32>
    %cst_47 = arith.constant dense<0.000000e+00> : vector<16xf32>
    %134 = vector.multi_reduction <add>, %133, %cst_47 [1] : vector<16x64xf32> to vector<16xf32>
    %135 = vector.shape_cast %134 : vector<16xf32> to vector<16x1xf32>
    %cst_48 = arith.constant 6.400000e+01 : f32
    %136 = vector.broadcast %cst_48 : f32 to vector<16x1xf32>
    %137 = arith.divf %135, %136 : vector<16x1xf32>
    %138 = vector.broadcast %137 : vector<16x1xf32> to vector<16x64xf32>
    %139 = arith.subf %133, %138 : vector<16x64xf32>
    %140 = arith.mulf %139, %139 : vector<16x64xf32>
    %cst_49 = arith.constant dense<0.000000e+00> : vector<16xf32>
    %141 = vector.multi_reduction <add>, %140, %cst_49 [1] : vector<16x64xf32> to vector<16xf32>
    %142 = vector.shape_cast %141 : vector<16xf32> to vector<16x1xf32>
    %cst_50 = arith.constant 6.400000e+01 : f32
    %143 = vector.broadcast %cst_50 : f32 to vector<16x1xf32>
    %144 = arith.divf %142, %143 : vector<16x1xf32>
    %145 = vector.broadcast %137 : vector<16x1xf32> to vector<16x64xf32>
    %146 = arith.subf %133, %145 : vector<16x64xf32>
    %cst_51 = arith.constant 9.99999974E-6 : f32
    %147 = vector.broadcast %cst_51 : f32 to vector<16x1xf32>
    %148 = arith.addf %144, %147 : vector<16x1xf32>
    %149 = math.rsqrt %148 : vector<16x1xf32>
    %150 = vector.broadcast %149 : vector<16x1xf32> to vector<16x64xf32>
    %151 = arith.mulf %146, %150 : vector<16x64xf32>
    %152 = vector.broadcast %131 : vector<1x64xf32> to vector<16x64xf32>
    %153 = arith.mulf %151, %152 : vector<16x64xf32>
    %154 = vector.broadcast %132 : vector<1x64xf32> to vector<16x64xf32>
    %155 = arith.addf %153, %154 : vector<16x64xf32>
    %c328 = arith.constant 328 : index
    %c0_52 = arith.constant 0 : index
    %156 = vector.load %arg1[%c328, %c0_52] : memref<744x192xf32, #tpu.memory_space<vmem>>, vector<64x192xf32>
    %c721 = arith.constant 721 : index
    %c0_53 = arith.constant 0 : index
    %157 = vector.load %arg1[%c721, %c0_53] : memref<744x192xf32, #tpu.memory_space<vmem>>, vector<1x192xf32>
    %cst_54 = arith.constant dense<0.000000e+00> : vector<16x192xf32>
    %158 = tpu.matmul %155, %156, %cst_54 {dimension_numbers = #tpu.dot_dimension_numbers<[1], [0], [0], [1], [0, 0, 1, 1], [], []>} : vector<16x64xf32>, vector<64x192xf32>, vector<16x192xf32> -> vector<16x192xf32>
    %159 = vector.broadcast %157 : vector<1x192xf32> to vector<16x192xf32>
    %160 = arith.addf %158, %159 : vector<16x192xf32>
    %161 = vector.extract_strided_slice %160 {offsets = [0, 0], sizes = [16, 64], strides = [1, 1]} : vector<16x192xf32> to vector<16x64xf32>
    %162 = vector.shape_cast %161 : vector<16x64xf32> to vector<2x8x64xf32>
    %163 = vector.extract_strided_slice %160 {offsets = [0, 64], sizes = [16, 64], strides = [1, 1]} : vector<16x192xf32> to vector<16x64xf32>
    %164 = vector.shape_cast %163 : vector<16x64xf32> to vector<2x8x64xf32>
    %165 = vector.extract_strided_slice %160 {offsets = [0, 128], sizes = [16, 64], strides = [1, 1]} : vector<16x192xf32> to vector<16x64xf32>
    %166 = vector.shape_cast %165 : vector<16x64xf32> to vector<2x8x64xf32>
    %167 = vector.extract_strided_slice %162 {offsets = [0, 0, 0], sizes = [2, 8, 16], strides = [1, 1, 1]} : vector<2x8x64xf32> to vector<2x8x16xf32>
    %168 = vector.extract_strided_slice %164 {offsets = [0, 0, 0], sizes = [2, 8, 16], strides = [1, 1, 1]} : vector<2x8x64xf32> to vector<2x8x16xf32>
    %169 = vector.extract_strided_slice %166 {offsets = [0, 0, 0], sizes = [2, 8, 16], strides = [1, 1, 1]} : vector<2x8x64xf32> to vector<2x8x16xf32>
    "tpu.trace_start"() <{level = 10 : i32, message = "bqd,bkd->bqk"}> : () -> ()
    %cst_55 = arith.constant dense<0.000000e+00> : vector<2x8x8xf32>
    %170 = tpu.matmul %167, %168, %cst_55 {dimension_numbers = #tpu.dot_dimension_numbers<[2], [2], [1], [1], [0, 0, 0, 1, 1, 1], [0], [0]>} : vector<2x8x16xf32>, vector<2x8x16xf32>, vector<2x8x8xf32> -> vector<2x8x8xf32>
    "tpu.trace_stop"() : () -> ()
    %cst_56 = arith.constant 2.500000e-01 : f32
    %171 = vector.broadcast %cst_56 : f32 to vector<2x8x8xf32>
    %172 = arith.mulf %170, %171 : vector<2x8x8xf32>
    %cst_57 = arith.constant dense<0xFF800000> : vector<2x8xf32>
    %173 = vector.multi_reduction <maximumf>, %172, %cst_57 [2] : vector<2x8x8xf32> to vector<2x8xf32>
    %174 = vector.shape_cast %173 : vector<2x8xf32> to vector<2x8x1xf32>
    %175 = vector.broadcast %174 : vector<2x8x1xf32> to vector<2x8x8xf32>
    %176 = arith.subf %172, %175 : vector<2x8x8xf32>
    %177 = math.exp %176 : vector<2x8x8xf32>
    %cst_58 = arith.constant dense<0.000000e+00> : vector<2x8xf32>
    %178 = vector.multi_reduction <add>, %177, %cst_58 [2] : vector<2x8x8xf32> to vector<2x8xf32>
    %179 = vector.shape_cast %178 : vector<2x8xf32> to vector<2x8x1xf32>
    %180 = vector.broadcast %179 : vector<2x8x1xf32> to vector<2x8x8xf32>
    %181 = arith.divf %177, %180 : vector<2x8x8xf32>
    "tpu.trace_start"() <{level = 10 : i32, message = "bqk,bkd->bqd"}> : () -> ()
    %cst_59 = arith.constant dense<0.000000e+00> : vector<2x8x16xf32>
    %182 = tpu.matmul %181, %169, %cst_59 {dimension_numbers = #tpu.dot_dimension_numbers<[2], [1], [1], [2], [0, 0, 0, 1, 1, 2], [0], [0]>} : vector<2x8x8xf32>, vector<2x8x16xf32>, vector<2x8x16xf32> -> vector<2x8x16xf32>
    "tpu.trace_stop"() : () -> ()
    %183 = vector.extract_strided_slice %162 {offsets = [0, 0, 16], sizes = [2, 8, 16], strides = [1, 1, 1]} : vector<2x8x64xf32> to vector<2x8x16xf32>
    %184 = vector.extract_strided_slice %164 {offsets = [0, 0, 16], sizes = [2, 8, 16], strides = [1, 1, 1]} : vector<2x8x64xf32> to vector<2x8x16xf32>
    %185 = vector.extract_strided_slice %166 {offsets = [0, 0, 16], sizes = [2, 8, 16], strides = [1, 1, 1]} : vector<2x8x64xf32> to vector<2x8x16xf32>
    "tpu.trace_start"() <{level = 10 : i32, message = "bqd,bkd->bqk"}> : () -> ()
    %cst_60 = arith.constant dense<0.000000e+00> : vector<2x8x8xf32>
    %186 = tpu.matmul %183, %184, %cst_60 {dimension_numbers = #tpu.dot_dimension_numbers<[2], [2], [1], [1], [0, 0, 0, 1, 1, 1], [0], [0]>} : vector<2x8x16xf32>, vector<2x8x16xf32>, vector<2x8x8xf32> -> vector<2x8x8xf32>
    "tpu.trace_stop"() : () -> ()
    %cst_61 = arith.constant 2.500000e-01 : f32
    %187 = vector.broadcast %cst_61 : f32 to vector<2x8x8xf32>
    %188 = arith.mulf %186, %187 : vector<2x8x8xf32>
    %cst_62 = arith.constant dense<0xFF800000> : vector<2x8xf32>
    %189 = vector.multi_reduction <maximumf>, %188, %cst_62 [2] : vector<2x8x8xf32> to vector<2x8xf32>
    %190 = vector.shape_cast %189 : vector<2x8xf32> to vector<2x8x1xf32>
    %191 = vector.broadcast %190 : vector<2x8x1xf32> to vector<2x8x8xf32>
    %192 = arith.subf %188, %191 : vector<2x8x8xf32>
    %193 = math.exp %192 : vector<2x8x8xf32>
    %cst_63 = arith.constant dense<0.000000e+00> : vector<2x8xf32>
    %194 = vector.multi_reduction <add>, %193, %cst_63 [2] : vector<2x8x8xf32> to vector<2x8xf32>
    %195 = vector.shape_cast %194 : vector<2x8xf32> to vector<2x8x1xf32>
    %196 = vector.broadcast %195 : vector<2x8x1xf32> to vector<2x8x8xf32>
    %197 = arith.divf %193, %196 : vector<2x8x8xf32>
    "tpu.trace_start"() <{level = 10 : i32, message = "bqk,bkd->bqd"}> : () -> ()
    %cst_64 = arith.constant dense<0.000000e+00> : vector<2x8x16xf32>
    %198 = tpu.matmul %197, %185, %cst_64 {dimension_numbers = #tpu.dot_dimension_numbers<[2], [1], [1], [2], [0, 0, 0, 1, 1, 2], [0], [0]>} : vector<2x8x8xf32>, vector<2x8x16xf32>, vector<2x8x16xf32> -> vector<2x8x16xf32>
    "tpu.trace_stop"() : () -> ()
    %199 = vector.extract_strided_slice %162 {offsets = [0, 0, 32], sizes = [2, 8, 16], strides = [1, 1, 1]} : vector<2x8x64xf32> to vector<2x8x16xf32>
    %200 = vector.extract_strided_slice %164 {offsets = [0, 0, 32], sizes = [2, 8, 16], strides = [1, 1, 1]} : vector<2x8x64xf32> to vector<2x8x16xf32>
    %201 = vector.extract_strided_slice %166 {offsets = [0, 0, 32], sizes = [2, 8, 16], strides = [1, 1, 1]} : vector<2x8x64xf32> to vector<2x8x16xf32>
    "tpu.trace_start"() <{level = 10 : i32, message = "bqd,bkd->bqk"}> : () -> ()
    %cst_65 = arith.constant dense<0.000000e+00> : vector<2x8x8xf32>
    %202 = tpu.matmul %199, %200, %cst_65 {dimension_numbers = #tpu.dot_dimension_numbers<[2], [2], [1], [1], [0, 0, 0, 1, 1, 1], [0], [0]>} : vector<2x8x16xf32>, vector<2x8x16xf32>, vector<2x8x8xf32> -> vector<2x8x8xf32>
    "tpu.trace_stop"() : () -> ()
    %cst_66 = arith.constant 2.500000e-01 : f32
    %203 = vector.broadcast %cst_66 : f32 to vector<2x8x8xf32>
    %204 = arith.mulf %202, %203 : vector<2x8x8xf32>
    %cst_67 = arith.constant dense<0xFF800000> : vector<2x8xf32>
    %205 = vector.multi_reduction <maximumf>, %204, %cst_67 [2] : vector<2x8x8xf32> to vector<2x8xf32>
    %206 = vector.shape_cast %205 : vector<2x8xf32> to vector<2x8x1xf32>
    %207 = vector.broadcast %206 : vector<2x8x1xf32> to vector<2x8x8xf32>
    %208 = arith.subf %204, %207 : vector<2x8x8xf32>
    %209 = math.exp %208 : vector<2x8x8xf32>
    %cst_68 = arith.constant dense<0.000000e+00> : vector<2x8xf32>
    %210 = vector.multi_reduction <add>, %209, %cst_68 [2] : vector<2x8x8xf32> to vector<2x8xf32>
    %211 = vector.shape_cast %210 : vector<2x8xf32> to vector<2x8x1xf32>
    %212 = vector.broadcast %211 : vector<2x8x1xf32> to vector<2x8x8xf32>
    %213 = arith.divf %209, %212 : vector<2x8x8xf32>
    "tpu.trace_start"() <{level = 10 : i32, message = "bqk,bkd->bqd"}> : () -> ()
    %cst_69 = arith.constant dense<0.000000e+00> : vector<2x8x16xf32>
    %214 = tpu.matmul %213, %201, %cst_69 {dimension_numbers = #tpu.dot_dimension_numbers<[2], [1], [1], [2], [0, 0, 0, 1, 1, 2], [0], [0]>} : vector<2x8x8xf32>, vector<2x8x16xf32>, vector<2x8x16xf32> -> vector<2x8x16xf32>
    "tpu.trace_stop"() : () -> ()
    %215 = vector.extract_strided_slice %162 {offsets = [0, 0, 48], sizes = [2, 8, 16], strides = [1, 1, 1]} : vector<2x8x64xf32> to vector<2x8x16xf32>
    %216 = vector.extract_strided_slice %164 {offsets = [0, 0, 48], sizes = [2, 8, 16], strides = [1, 1, 1]} : vector<2x8x64xf32> to vector<2x8x16xf32>
    %217 = vector.extract_strided_slice %166 {offsets = [0, 0, 48], sizes = [2, 8, 16], strides = [1, 1, 1]} : vector<2x8x64xf32> to vector<2x8x16xf32>
    "tpu.trace_start"() <{level = 10 : i32, message = "bqd,bkd->bqk"}> : () -> ()
    %cst_70 = arith.constant dense<0.000000e+00> : vector<2x8x8xf32>
    %218 = tpu.matmul %215, %216, %cst_70 {dimension_numbers = #tpu.dot_dimension_numbers<[2], [2], [1], [1], [0, 0, 0, 1, 1, 1], [0], [0]>} : vector<2x8x16xf32>, vector<2x8x16xf32>, vector<2x8x8xf32> -> vector<2x8x8xf32>
    "tpu.trace_stop"() : () -> ()
    %cst_71 = arith.constant 2.500000e-01 : f32
    %219 = vector.broadcast %cst_71 : f32 to vector<2x8x8xf32>
    %220 = arith.mulf %218, %219 : vector<2x8x8xf32>
    %cst_72 = arith.constant dense<0xFF800000> : vector<2x8xf32>
    %221 = vector.multi_reduction <maximumf>, %220, %cst_72 [2] : vector<2x8x8xf32> to vector<2x8xf32>
    %222 = vector.shape_cast %221 : vector<2x8xf32> to vector<2x8x1xf32>
    %223 = vector.broadcast %222 : vector<2x8x1xf32> to vector<2x8x8xf32>
    %224 = arith.subf %220, %223 : vector<2x8x8xf32>
    %225 = math.exp %224 : vector<2x8x8xf32>
    %cst_73 = arith.constant dense<0.000000e+00> : vector<2x8xf32>
    %226 = vector.multi_reduction <add>, %225, %cst_73 [2] : vector<2x8x8xf32> to vector<2x8xf32>
    %227 = vector.shape_cast %226 : vector<2x8xf32> to vector<2x8x1xf32>
    %228 = vector.broadcast %227 : vector<2x8x1xf32> to vector<2x8x8xf32>
    %229 = arith.divf %225, %228 : vector<2x8x8xf32>
    "tpu.trace_start"() <{level = 10 : i32, message = "bqk,bkd->bqd"}> : () -> ()
    %cst_74 = arith.constant dense<0.000000e+00> : vector<2x8x16xf32>
    %230 = tpu.matmul %229, %217, %cst_74 {dimension_numbers = #tpu.dot_dimension_numbers<[2], [1], [1], [2], [0, 0, 0, 1, 1, 2], [0], [0]>} : vector<2x8x8xf32>, vector<2x8x16xf32>, vector<2x8x16xf32> -> vector<2x8x16xf32>
    "tpu.trace_stop"() : () -> ()
    %231 = tpu.concatenate %182, %198, %214, %230 in 2 : vector<2x8x16xf32>, vector<2x8x16xf32>, vector<2x8x16xf32>, vector<2x8x16xf32> -> vector<2x8x64xf32>
    %232 = vector.shape_cast %231 : vector<2x8x64xf32> to vector<16x64xf32>
    %c392 = arith.constant 392 : index
    %c0_75 = arith.constant 0 : index
    %233 = vector.load %arg1[%c392, %c0_75] : memref<744x192xf32, #tpu.memory_space<vmem>>, vector<64x64xf32>
    %c722 = arith.constant 722 : index
    %c0_76 = arith.constant 0 : index
    %234 = vector.load %arg1[%c722, %c0_76] : memref<744x192xf32, #tpu.memory_space<vmem>>, vector<1x64xf32>
    %cst_77 = arith.constant dense<0.000000e+00> : vector<16x64xf32>
    %235 = tpu.matmul %232, %233, %cst_77 {dimension_numbers = #tpu.dot_dimension_numbers<[1], [0], [0], [1], [0, 0, 1, 1], [], []>} : vector<16x64xf32>, vector<64x64xf32>, vector<16x64xf32> -> vector<16x64xf32>
    %236 = vector.broadcast %234 : vector<1x64xf32> to vector<16x64xf32>
    %237 = arith.addf %235, %236 : vector<16x64xf32>
    %c723 = arith.constant 723 : index
    %c0_78 = arith.constant 0 : index
    %238 = vector.load %arg1[%c723, %c0_78] : memref<744x192xf32, #tpu.memory_space<vmem>>, vector<1x64xf32>
    %c724 = arith.constant 724 : index
    %c0_79 = arith.constant 0 : index
    %239 = vector.load %arg1[%c724, %c0_79] : memref<744x192xf32, #tpu.memory_space<vmem>>, vector<1x64xf32>
    %240 = arith.addf %155, %237 : vector<16x64xf32>
    %cst_80 = arith.constant dense<0.000000e+00> : vector<16xf32>
    %241 = vector.multi_reduction <add>, %240, %cst_80 [1] : vector<16x64xf32> to vector<16xf32>
    %242 = vector.shape_cast %241 : vector<16xf32> to vector<16x1xf32>
    %cst_81 = arith.constant 6.400000e+01 : f32
    %243 = vector.broadcast %cst_81 : f32 to vector<16x1xf32>
    %244 = arith.divf %242, %243 : vector<16x1xf32>
    %245 = vector.broadcast %244 : vector<16x1xf32> to vector<16x64xf32>
    %246 = arith.subf %240, %245 : vector<16x64xf32>
    %247 = arith.mulf %246, %246 : vector<16x64xf32>
    %cst_82 = arith.constant dense<0.000000e+00> : vector<16xf32>
    %248 = vector.multi_reduction <add>, %247, %cst_82 [1] : vector<16x64xf32> to vector<16xf32>
    %249 = vector.shape_cast %248 : vector<16xf32> to vector<16x1xf32>
    %cst_83 = arith.constant 6.400000e+01 : f32
    %250 = vector.broadcast %cst_83 : f32 to vector<16x1xf32>
    %251 = arith.divf %249, %250 : vector<16x1xf32>
    %252 = vector.broadcast %244 : vector<16x1xf32> to vector<16x64xf32>
    %253 = arith.subf %240, %252 : vector<16x64xf32>
    %cst_84 = arith.constant 9.99999974E-6 : f32
    %254 = vector.broadcast %cst_84 : f32 to vector<16x1xf32>
    %255 = arith.addf %251, %254 : vector<16x1xf32>
    %256 = math.rsqrt %255 : vector<16x1xf32>
    %257 = vector.broadcast %256 : vector<16x1xf32> to vector<16x64xf32>
    %258 = arith.mulf %253, %257 : vector<16x64xf32>
    %259 = vector.broadcast %238 : vector<1x64xf32> to vector<16x64xf32>
    %260 = arith.mulf %258, %259 : vector<16x64xf32>
    %261 = vector.broadcast %239 : vector<1x64xf32> to vector<16x64xf32>
    %262 = arith.addf %260, %261 : vector<16x64xf32>
    %c456 = arith.constant 456 : index
    %c0_85 = arith.constant 0 : index
    %263 = vector.load %arg1[%c456, %c0_85] : memref<744x192xf32, #tpu.memory_space<vmem>>, vector<64x128xf32>
    %c725 = arith.constant 725 : index
    %c0_86 = arith.constant 0 : index
    %264 = vector.load %arg1[%c725, %c0_86] : memref<744x192xf32, #tpu.memory_space<vmem>>, vector<1x128xf32>
    %cst_87 = arith.constant dense<0.000000e+00> : vector<16x128xf32>
    %265 = tpu.matmul %262, %263, %cst_87 {dimension_numbers = #tpu.dot_dimension_numbers<[1], [0], [0], [1], [0, 0, 1, 1], [], []>} : vector<16x64xf32>, vector<64x128xf32>, vector<16x128xf32> -> vector<16x128xf32>
    %266 = vector.broadcast %264 : vector<1x128xf32> to vector<16x128xf32>
    %267 = arith.addf %265, %266 : vector<16x128xf32>
    %cst_88 = arith.constant 0.000000e+00 : f32
    %268 = vector.broadcast %cst_88 : f32 to vector<16x128xf32>
    %269 = arith.maximumf %267, %268 : vector<16x128xf32>
    %c520 = arith.constant 520 : index
    %c0_89 = arith.constant 0 : index
    %270 = vector.load %arg1[%c520, %c0_89] : memref<744x192xf32, #tpu.memory_space<vmem>>, vector<128x64xf32>
    %c726 = arith.constant 726 : index
    %c0_90 = arith.constant 0 : index
    %271 = vector.load %arg1[%c726, %c0_90] : memref<744x192xf32, #tpu.memory_space<vmem>>, vector<1x64xf32>
    %cst_91 = arith.constant dense<0.000000e+00> : vector<16x64xf32>
    %272 = tpu.matmul %269, %270, %cst_91 {dimension_numbers = #tpu.dot_dimension_numbers<[1], [0], [0], [1], [0, 0, 1, 1], [], []>} : vector<16x128xf32>, vector<128x64xf32>, vector<16x64xf32> -> vector<16x64xf32>
    %273 = vector.broadcast %271 : vector<1x64xf32> to vector<16x64xf32>
    %274 = arith.addf %272, %273 : vector<16x64xf32>
    %c727 = arith.constant 727 : index
    %c0_92 = arith.constant 0 : index
    %275 = vector.load %arg1[%c727, %c0_92] : memref<744x192xf32, #tpu.memory_space<vmem>>, vector<1x64xf32>
    %c728 = arith.constant 728 : index
    %c0_93 = arith.constant 0 : index
    %276 = vector.load %arg1[%c728, %c0_93] : memref<744x192xf32, #tpu.memory_space<vmem>>, vector<1x64xf32>
    %277 = arith.addf %262, %274 : vector<16x64xf32>
    %cst_94 = arith.constant dense<0.000000e+00> : vector<16xf32>
    %278 = vector.multi_reduction <add>, %277, %cst_94 [1] : vector<16x64xf32> to vector<16xf32>
    %279 = vector.shape_cast %278 : vector<16xf32> to vector<16x1xf32>
    %cst_95 = arith.constant 6.400000e+01 : f32
    %280 = vector.broadcast %cst_95 : f32 to vector<16x1xf32>
    %281 = arith.divf %279, %280 : vector<16x1xf32>
    %282 = vector.broadcast %281 : vector<16x1xf32> to vector<16x64xf32>
    %283 = arith.subf %277, %282 : vector<16x64xf32>
    %284 = arith.mulf %283, %283 : vector<16x64xf32>
    %cst_96 = arith.constant dense<0.000000e+00> : vector<16xf32>
    %285 = vector.multi_reduction <add>, %284, %cst_96 [1] : vector<16x64xf32> to vector<16xf32>
    %286 = vector.shape_cast %285 : vector<16xf32> to vector<16x1xf32>
    %cst_97 = arith.constant 6.400000e+01 : f32
    %287 = vector.broadcast %cst_97 : f32 to vector<16x1xf32>
    %288 = arith.divf %286, %287 : vector<16x1xf32>
    %289 = vector.broadcast %281 : vector<16x1xf32> to vector<16x64xf32>
    %290 = arith.subf %277, %289 : vector<16x64xf32>
    %cst_98 = arith.constant 9.99999974E-6 : f32
    %291 = vector.broadcast %cst_98 : f32 to vector<16x1xf32>
    %292 = arith.addf %288, %291 : vector<16x1xf32>
    %293 = math.rsqrt %292 : vector<16x1xf32>
    %294 = vector.broadcast %293 : vector<16x1xf32> to vector<16x64xf32>
    %295 = arith.mulf %290, %294 : vector<16x64xf32>
    %296 = vector.broadcast %275 : vector<1x64xf32> to vector<16x64xf32>
    %297 = arith.mulf %295, %296 : vector<16x64xf32>
    %298 = vector.broadcast %276 : vector<1x64xf32> to vector<16x64xf32>
    %299 = arith.addf %297, %298 : vector<16x64xf32>
    %300 = vector.shape_cast %299 : vector<16x64xf32> to vector<2x8x64xf32>
    %301 = vector.extract_strided_slice %300 {offsets = [0, 7, 0], sizes = [2, 1, 64], strides = [1, 1, 1]} : vector<2x8x64xf32> to vector<2x1x64xf32>
    %302 = vector.shape_cast %301 : vector<2x1x64xf32> to vector<2x64xf32>
    %c648 = arith.constant 648 : index
    %c0_99 = arith.constant 0 : index
    %303 = vector.load %arg1[%c648, %c0_99] : memref<744x192xf32, #tpu.memory_space<vmem>>, vector<64x4xf32>
    %c729 = arith.constant 729 : index
    %c0_100 = arith.constant 0 : index
    %304 = vector.load %arg1[%c729, %c0_100] : memref<744x192xf32, #tpu.memory_space<vmem>>, vector<1x4xf32>
    %cst_101 = arith.constant dense<0.000000e+00> : vector<2x4xf32>
    %305 = tpu.matmul %302, %303, %cst_101 {dimension_numbers = #tpu.dot_dimension_numbers<[1], [0], [0], [1], [0, 0, 1, 1], [], []>} : vector<2x64xf32>, vector<64x4xf32>, vector<2x4xf32> -> vector<2x4xf32>
    %306 = vector.broadcast %304 : vector<1x4xf32> to vector<2x4xf32>
    %307 = arith.addf %305, %306 : vector<2x4xf32>
    %c0_102 = arith.constant 0 : index
    %c0_103 = arith.constant 0 : index
    %308 = vector.load %arg2[%c0_102, %c0_103] : memref<2x4xf32, #tpu.memory_space<vmem>>, vector<2x4xf32>
    tpu.vector_store %arg2[%c0_102, %c0_103], %307 {strides = array<i32>} : memref<2x4xf32, #tpu.memory_space<vmem>>, vector<2x4xf32>,
    return
  }
}

</mosaic_0001>

<llo_original>
// kernel: weather_transformer_forward.1
$region0: #{weather_transformer_forward.1}
  #allocation0 [shape = 'u32[]', space=smem, size = 0x4, offset = 0x4, fixed_abs, tag = 'smem constant byte address 0x4 - core index']
  #allocation1 [shape = 'u32[72,128]{1,0:T(1,128)}', space=vmem, size = 0x9000, scoped, tag = 'internal scratch']
  %s0 = inlined_call_operand.vmem [shape: f32[16,4], index: 0, kind: input, shape index: {}]
  %s1 = inlined_call_operand.vmem [shape: f32[744,192], index: 1, kind: input, shape index: {}]
  %s2 = inlined_call_operand.hbm [shape: f32[2,4], index: 2, kind: output, shape index: {}]
  %s3 = sld [smem:[#allocation0]]
  $region18: #{weather_transformer_forward.1} parent=0
    _
  %s5 = ssub.s32 1, %s3
  %s6 = scalar_select 0, %s5, %s3
  $region1: #{weather_transformer_forward.1} parent=0
    #allocation2 [shape = 'u8[1024]{0}', space=vmem, size = 0x400, scoped, tag = 'output window, operand 0, single buffered']
    #allocation3 [shape = 's32[1]{0}', space=sflag, size = 0x4, scoped, tag = 'scoped memory for weather_transformer_forward.1']
    %7 = vsyncpa [#allocation3], 0
    // Predicated region
    $region2: #{weather_transformer_forward.1} parent=1 // pred_check
      _
    $region3: #{weather_transformer_forward.1} parent=1 // pred_check_branch
      %9 = sbr.rel (0) target = $region5
    $region4: #{weather_transformer_forward.1} parent=1 // pred_region
      _
    $region5: #{weather_transformer_forward.1} parent=1 // pred_fallthru
      _
    // Predicated region
    $region6: #{weather_transformer_forward.1} parent=1 // pred_check
      _
    $region7: #{weather_transformer_forward.1} parent=1 // pred_check_branch
      %11 = sbr.rel (0) target = $region9
    $region8: #{weather_transformer_forward.1} parent=1 // pred_region
      _
    $region9: #{weather_transformer_forward.1} parent=1 // pred_fallthru
      _
    %v12 = vld [vmem:[%s1] sm:$0xf]
    %v13 = vld [vmem:[%s1 + $0x590] ss:$0 sm:$0xff]
    %v14 = vld [vmem:[%s0] sm:$0xff]
    %v15 = vld [vmem:[%s0 + $0x8] sm:$0xff]
    %vm16 = vcmask 31744
    %v18 = vsel %vm16, %v14, 0
    %v21 = vsel %vm16, %v15, 0
    %vm23 = vcmask 1043456
    %v25 = vsel %vm23, %v12, 0
    %27 = vmatpush.msra.mxu0 0.0
    %28 = vmatpush.msra.mxu0 0.0
    %29 = vmatpush.msra.mxu0 0.0
    %30 = vmatpush.msra.mxu0 0.0
    %31 = vmatpush.msra.mxu0 0.0
    %32 = vmatpush.msra.mxu0 0.0
    %33 = vmatpush.msra.mxu0 0.0
    %34 = vmatpush.msra.mxu0 0.0
    %35 = vmatpush.msra.mxu0 0.0
    %36 = vmatpush.msra.mxu0 0.0
    %37 = vmatpush.msra.mxu0 0.0
    %38 = vmatpush.msra.mxu0 0.0
    %39 = vmatpush.msra.mxu0 0.0
    %40 = vmatpush.msra.mxu0 0.0
    %41 = vmatpush.msra.mxu0 0.0
    %42 = vmatpush.msra.mxu0 %v25
    %43 = vmatmul.f32.gmra.mxu0 %v18
    %v44 = vpop.f32.mrf.mxu0
    %v45 = vadd.f32 %v13, %v44
    %46 = vmatmul.f32.gmra.mxu0 %v21
    %v47 = vpop.f32.mrf.mxu0
    %v48 = vadd.f32 %v13, %v47
    %49 = vdwg.mxu0
    %v50 = vld [vmem:[%s1 + $0x5c0] sm:$0xff]
    %v51 = vadd.f32 %v45, %v50
    %v52 = vadd.f32 %v48, %v50
    %v53 = vld [vmem:[%s1 + $0x10] sm:$0xff]
    %v54 = vld [vmem:[%s1 + $0x18] sm:$0xff]
    %v55 = vld [vmem:[%s1 + $0x20] sm:$0xff]
    %v56 = vld [vmem:[%s1 + $0x28] sm:$0xff]
    %v57 = vld [vmem:[%s1 + $0x30] sm:$0xff]
    %v58 = vld [vmem:[%s1 + $0x38] sm:$0xff]
    %v59 = vld [vmem:[%s1 + $0x40] sm:$0xff]
    %v60 = vld [vmem:[%s1 + $0x48] sm:$0xff]
    %v61 = vld [vmem:[%s1 + $0x50] sm:$0xff]
    %v62 = vld [vmem:[%s1 + $0x58] sm:$0xff]
    %v63 = vld [vmem:[%s1 + $0x60] sm:$0xff]
    %v64 = vld [vmem:[%s1 + $0x68] sm:$0xff]
    %v65 = vld [vmem:[%s1 + $0x70] sm:$0xff]
    %v66 = vld [vmem:[%s1 + $0x78] sm:$0xff]
    %v67 = vld [vmem:[%s1 + $0x80] sm:$0xff]
    %v68 = vld [vmem:[%s1 + $0x88] sm:$0xff]
    %s69 = scalar_lea.vmem %s1, 1425
    %v70 = vld [vmem:[%s69] ss:$8 sm:$0x3]
    %v72 = vperm.slane %v70, 0
    %v73 = vperm.slane %v70, 1
    %vm76 = vcmask 523264
    %v78 = vsel %vm76, %v51, 0
    %v81 = vsel %vm76, %v52, 0
    %83 = vmatpush.msra.mxu0 0.0
    %84 = vmatpush.msra.mxu0 0.0
    %85 = vmatpush.msra.mxu0 0.0
    %86 = vmatpush.msra.mxu0 0.0
    %87 = vmatpush.msra.mxu0 0.0
    %88 = vmatpush.msra.mxu0 0.0
    %89 = vmatpush.msra.mxu0 0.0
    %90 = vmatpush.msra.mxu0 0.0
    %91 = vmatpush.msra.mxu0 %v67
    %92 = vmatpush.msra.mxu0 %v65
    %93 = vmatpush.msra.mxu0 %v63
    %94 = vmatpush.msra.mxu0 %v61
    %95 = vmatpush.msra.mxu0 %v59
    %96 = vmatpush.msra.mxu0 %v57
    %97 = vmatpush.msra.mxu0 %v55
    %98 = vmatpush.msra.mxu0 %v53
    %99 = vmatmul.f32.gmra.mxu0 %v78
    %v100 = vpop.f32.mrf.mxu0
    %v101 = vadd.f32 %v72, %v100
    %102 = vmatmul.f32.gmra.mxu0 %v81
    %v103 = vpop.f32.mrf.mxu0
    %v104 = vadd.f32 %v72, %v103
    %105 = vdwg.mxu0
    %106 = vmatpush.msra.mxu0 0.0
    %107 = vmatpush.msra.mxu0 0.0
    %108 = vmatpush.msra.mxu0 0.0
    %109 = vmatpush.msra.mxu0 0.0
    %110 = vmatpush.msra.mxu0 0.0
    %111 = vmatpush.msra.mxu0 0.0
    %112 = vmatpush.msra.mxu0 0.0
    %113 = vmatpush.msra.mxu0 0.0
    %114 = vmatpush.msra.mxu0 %v68
    %115 = vmatpush.msra.mxu0 %v66
    %116 = vmatpush.msra.mxu0 %v64
    %117 = vmatpush.msra.mxu0 %v62
    %118 = vmatpush.msra.mxu0 %v60
    %119 = vmatpush.msra.mxu0 %v58
    %120 = vmatpush.msra.mxu0 %v56
    %121 = vmatpush.msra.mxu0 %v54
    %122 = vmatmul.f32.gmra.mxu0 %v78
    %v123 = vpop.f32.mrf.mxu0
    %v124 = vadd.f32 %v73, %v123
    %125 = vmatmul.f32.gmra.mxu0 %v81
    %v126 = vpop.f32.mrf.mxu0
    %v127 = vadd.f32 %v73, %v126
    %128 = vdwg.mxu0
    %130 = vrot.lane.b32.xlu0 %v101, 64
    %v131 = vpop.permute.xlu0 %130
    %vm132 = vcmask 130048
    %v133 = vsel %vm132, %v101, 0
    %v135 = vsel %vm132, %v131, 0
    %137 = vmatpush.xpose.msra.mxu0 0.0
    %138 = vmatpush.xpose.msra.mxu0 0.0
    %139 = vmatpush.xpose.msra.mxu0 0.0
    %140 = vmatpush.xpose.msra.mxu0 0.0
    %141 = vmatpush.xpose.msra.mxu0 0.0
    %142 = vmatpush.xpose.msra.mxu0 0.0
    %143 = vmatpush.xpose.msra.mxu0 0.0
    %144 = vmatpush.xpose.msra.mxu0 0.0
    %145 = vmatpush.xpose.msra.mxu0 0.0
    %146 = vmatpush.xpose.msra.mxu0 0.0
    %147 = vmatpush.xpose.msra.mxu0 0.0
    %148 = vmatpush.xpose.msra.mxu0 0.0
    %149 = vmatpush.xpose.msra.mxu0 0.0
    %150 = vmatpush.xpose.msra.mxu0 0.0
    %151 = vmatpush.xpose.msra.mxu0 0.0
    %152 = vmatpush.xpose.msra.mxu0 %v135
    %153 = vmatmul.f32.gmra.mxu0 %v133
    %v154 = vpop.f32.mrf.mxu0
    %v155 = vadd.f32 0.0, %v154
    %156 = vdwg.mxu0
    %158 = vrot.lane.b32.xlu0 %v104, 64
    %v159 = vpop.permute.xlu0 %158
    %v160 = vsel %vm132, %v104, 0
    %v162 = vsel %vm132, %v159, 0
    %164 = vmatpush.xpose.msra.mxu0 0.0
    %165 = vmatpush.xpose.msra.mxu0 0.0
    %166 = vmatpush.xpose.msra.mxu0 0.0
    %167 = vmatpush.xpose.msra.mxu0 0.0
    %168 = vmatpush.xpose.msra.mxu0 0.0
    %169 = vmatpush.xpose.msra.mxu0 0.0
    %170 = vmatpush.xpose.msra.mxu0 0.0
    %171 = vmatpush.xpose.msra.mxu0 0.0
    %172 = vmatpush.xpose.msra.mxu0 0.0
    %173 = vmatpush.xpose.msra.mxu0 0.0
    %174 = vmatpush.xpose.msra.mxu0 0.0
    %175 = vmatpush.xpose.msra.mxu0 0.0
    %176 = vmatpush.xpose.msra.mxu0 0.0
    %177 = vmatpush.xpose.msra.mxu0 0.0
    %178 = vmatpush.xpose.msra.mxu0 0.0
    %179 = vmatpush.xpose.msra.mxu0 %v162
    %180 = vmatmul.f32.gmra.mxu0 %v160
    %v181 = vpop.f32.mrf.mxu0
    %v182 = vadd.f32 0.0, %v181
    %183 = vdwg.mxu0
    %v184 = vmul.f32 %v155, 0.25
    %v185 = vmul.f32 %v182, 0.25
    %vm186 = vcmask 64512
    %v187 = vsel %vm186, %v184, -inf
    %188 = vmax.xlane.f32.xlu0 %v187
    %v189 = vpop.xlane.xlu0 %188
    %v190 = vsel %vm186, %v185, -inf
    %191 = vmax.xlane.f32.xlu0 %v190
    %v192 = vpop.xlane.xlu0 %191
    %v193 = vsub.f32 %v184, %v189
    %v194 = vsub.f32 %v185, %v192
    %v195 = vmul.f32 %v193, 1.442695
    %v196 = vpow.pop %v195
    %v197 = vmul.f32 %v194, 1.442695
    %v198 = vpow.pop %v197
    %v199 = vsel %vm186, %v196, 0.0
    %200 = vadd.xlane.f32.xlu0 %v199
    %v201 = vpop.xlane.xlu0 %200
    %v202 = vsel %vm186, %v198, 0.0
    %203 = vadd.xlane.f32.xlu0 %v202
    %v204 = vpop.xlane.xlu0 %203
    %v205 = vrcp.pop %v201
    %v206 = vmul.f32 %v201, %v205
    %v207 = vsub.f32 1.0, %v206
    %v208 = vmul.f32 %v205, %v207
    %v209 = vadd.f32 %v205, %v208
    %vm210 = vweird.f32 %v201
    %vm211 = vweird.f32 %v205
    %vm212 = vmor %vm210, %vm211
    %v213 = vsel %vm212, %v205, %v209
    %v214 = vand.u32 2147483647, %v201
    %vm215 = vcmp.eq.f32.partialorder %v214, 8.507059e+37
    %v216 = vand.u32 %v201, 2147483648
    %v217 = vor.u32 1.1754944e-38, %v216
    %v218 = vsel %vm215, %v217, %v213
    %v219 = vmul.f32 %v196, %v218
    %v220 = vrcp.pop %v204
    %v221 = vmul.f32 %v204, %v220
    %v222 = vsub.f32 1.0, %v221
    %v223 = vmul.f32 %v220, %v222
    %v224 = vadd.f32 %v220, %v223
    %vm225 = vweird.f32 %v204
    %vm226 = vweird.f32 %v220
    %vm227 = vmor %vm225, %vm226
    %v228 = vsel %vm227, %v220, %v224
    %v229 = vand.u32 2147483647, %v204
    %vm230 = vcmp.eq.f32.partialorder %v229, 8.507059e+37
    %v231 = vand.u32 %v204, 2147483648
    %v232 = vor.u32 1.1754944e-38, %v231
    %v233 = vsel %vm230, %v232, %v228
    %v234 = vmul.f32 %v198, %v233
    %v236 = vsel %vm186, %v219, 0
    %238 = vmatpush.msra.mxu0 0.0
    %239 = vmatpush.msra.mxu0 0.0
    %240 = vmatpush.msra.mxu0 0.0
    %241 = vmatpush.msra.mxu0 0.0
    %242 = vmatpush.msra.mxu0 0.0
    %243 = vmatpush.msra.mxu0 0.0
    %244 = vmatpush.msra.mxu0 0.0
    %245 = vmatpush.msra.mxu0 0.0
    %246 = vmatpush.msra.mxu0 0.0
    %247 = vmatpush.msra.mxu0 0.0
    %248 = vmatpush.msra.mxu0 0.0
    %249 = vmatpush.msra.mxu0 0.0
    %250 = vmatpush.msra.mxu0 0.0
    %251 = vmatpush.msra.mxu0 0.0
    %252 = vmatpush.msra.mxu0 0.0
    %253 = vmatpush.msra.mxu0 %v124
    %254 = vmatmul.f32.gmra.mxu0 %v236
    %v255 = vpop.f32.mrf.mxu0
    %v256 = vadd.f32 0.0, %v255
    %257 = vdwg.mxu0
    %v259 = vsel %vm186, %v234, 0
    %261 = vmatpush.msra.mxu0 0.0
    %262 = vmatpush.msra.mxu0 0.0
    %263 = vmatpush.msra.mxu0 0.0
    %264 = vmatpush.msra.mxu0 0.0
    %265 = vmatpush.msra.mxu0 0.0
    %266 = vmatpush.msra.mxu0 0.0
    %267 = vmatpush.msra.mxu0 0.0
    %268 = vmatpush.msra.mxu0 0.0
    %269 = vmatpush.msra.mxu0 0.0
    %270 = vmatpush.msra.mxu0 0.0
    %271 = vmatpush.msra.mxu0 0.0
    %272 = vmatpush.msra.mxu0 0.0
    %273 = vmatpush.msra.mxu0 0.0
    %274 = vmatpush.msra.mxu0 0.0
    %275 = vmatpush.msra.mxu0 0.0
    %276 = vmatpush.msra.mxu0 %v127
    %277 = vmatmul.f32.gmra.mxu0 %v259
    %v278 = vpop.f32.mrf.mxu0
    %v279 = vadd.f32 0.0, %v278
    %280 = vdwg.mxu0
    %281 = vrot.lane.b32.xlu0 %v101, 112
    %v282 = vpop.permute.xlu0 %281
    %283 = vrot.lane.b32.xlu0 %v101, 48
    %v284 = vpop.permute.xlu0 %283
    %v285 = vsel %vm132, %v282, 0
    %v287 = vsel %vm132, %v284, 0
    %289 = vmatpush.xpose.msra.mxu0 0.0
    %290 = vmatpush.xpose.msra.mxu0 0.0
    %291 = vmatpush.xpose.msra.mxu0 0.0
    %292 = vmatpush.xpose.msra.mxu0 0.0
    %293 = vmatpush.xpose.msra.mxu0 0.0
    %294 = vmatpush.xpose.msra.mxu0 0.0
    %295 = vmatpush.xpose.msra.mxu0 0.0
    %296 = vmatpush.xpose.msra.mxu0 0.0
    %297 = vmatpush.xpose.msra.mxu0 0.0
    %298 = vmatpush.xpose.msra.mxu0 0.0
    %299 = vmatpush.xpose.msra.mxu0 0.0
    %300 = vmatpush.xpose.msra.mxu0 0.0
    %301 = vmatpush.xpose.msra.mxu0 0.0
    %302 = vmatpush.xpose.msra.mxu0 0.0
    %303 = vmatpush.xpose.msra.mxu0 0.0
    %304 = vmatpush.xpose.msra.mxu0 %v287
    %305 = vmatmul.f32.gmra.mxu0 %v285
    %v306 = vpop.f32.mrf.mxu0
    %v307 = vadd.f32 0.0, %v306
    %308 = vdwg.mxu0
    %309 = vrot.lane.b32.xlu0 %v104, 112
    %v310 = vpop.permute.xlu0 %309
    %311 = vrot.lane.b32.xlu0 %v104, 48
    %v312 = vpop.permute.xlu0 %311
    %v313 = vsel %vm132, %v310, 0
    %v315 = vsel %vm132, %v312, 0
    %317 = vmatpush.xpose.msra.mxu0 0.0
    %318 = vmatpush.xpose.msra.mxu0 0.0
    %319 = vmatpush.xpose.msra.mxu0 0.0
    %320 = vmatpush.xpose.msra.mxu0 0.0
    %321 = vmatpush.xpose.msra.mxu0 0.0
    %322 = vmatpush.xpose.msra.mxu0 0.0
    %323 = vmatpush.xpose.msra.mxu0 0.0
    %324 = vmatpush.xpose.msra.mxu0 0.0
    %325 = vmatpush.xpose.msra.mxu0 0.0
    %326 = vmatpush.xpose.msra.mxu0 0.0
    %327 = vmatpush.xpose.msra.mxu0 0.0
    %328 = vmatpush.xpose.msra.mxu0 0.0
    %329 = vmatpush.xpose.msra.mxu0 0.0
    %330 = vmatpush.xpose.msra.mxu0 0.0
    %331 = vmatpush.xpose.msra.mxu0 0.0
    %332 = vmatpush.xpose.msra.mxu0 %v315
    %333 = vmatmul.f32.gmra.mxu0 %v313
    %v334 = vpop.f32.mrf.mxu0
    %v335 = vadd.f32 0.0, %v334
    %336 = vdwg.mxu0
    %v337 = vmul.f32 %v307, 0.25
    %v338 = vmul.f32 %v335, 0.25
    %v339 = vsel %vm186, %v337, -inf
    %340 = vmax.xlane.f32.xlu0 %v339
    %v341 = vpop.xlane.xlu0 %340
    %v342 = vsel %vm186, %v338, -inf
    %343 = vmax.xlane.f32.xlu0 %v342
    %v344 = vpop.xlane.xlu0 %343
    %v345 = vsub.f32 %v337, %v341
    %v346 = vsub.f32 %v338, %v344
    %v347 = vmul.f32 %v345, 1.442695
    %v348 = vpow.pop %v347
    %v349 = vmul.f32 %v346, 1.442695
    %v350 = vpow.pop %v349
    %v351 = vsel %vm186, %v348, 0.0
    %352 = vadd.xlane.f32.xlu0 %v351
    %v353 = vpop.xlane.xlu0 %352
    %v354 = vsel %vm186, %v350, 0.0
    %355 = vadd.xlane.f32.xlu0 %v354
    %v356 = vpop.xlane.xlu0 %355
    %v357 = vrcp.pop %v353
    %v358 = vmul.f32 %v353, %v357
    %v359 = vsub.f32 1.0, %v358
    %v360 = vmul.f32 %v357, %v359
    %v361 = vadd.f32 %v357, %v360
    %vm362 = vweird.f32 %v353
    %vm363 = vweird.f32 %v357
    %vm364 = vmor %vm362, %vm363
    %v365 = vsel %vm364, %v357, %v361
    %v366 = vand.u32 2147483647, %v353
    %vm367 = vcmp.eq.f32.partialorder %v366, 8.507059e+37
    %v368 = vand.u32 %v353, 2147483648
    %v369 = vor.u32 1.1754944e-38, %v368
    %v370 = vsel %vm367, %v369, %v365
    %v371 = vmul.f32 %v348, %v370
    %v372 = vrcp.pop %v356
    %v373 = vmul.f32 %v356, %v372
    %v374 = vsub.f32 1.0, %v373
    %v375 = vmul.f32 %v372, %v374
    %v376 = vadd.f32 %v372, %v375
    %vm377 = vweird.f32 %v356
    %vm378 = vweird.f32 %v372
    %vm379 = vmor %vm377, %vm378
    %v380 = vsel %vm379, %v372, %v376
    %v381 = vand.u32 2147483647, %v356
    %vm382 = vcmp.eq.f32.partialorder %v381, 8.507059e+37
    %v383 = vand.u32 %v356, 2147483648
    %v384 = vor.u32 1.1754944e-38, %v383
    %v385 = vsel %vm382, %v384, %v380
    %v386 = vmul.f32 %v350, %v385
    %388 = vrot.lane.b32.xlu0 %v124, 112
    %v389 = vpop.permute.xlu0 %388
    %v392 = vsel %vm186, %v371, 0
    %394 = vmatpush.msra.mxu0 0.0
    %395 = vmatpush.msra.mxu0 0.0
    %396 = vmatpush.msra.mxu0 0.0
    %397 = vmatpush.msra.mxu0 0.0
    %398 = vmatpush.msra.mxu0 0.0
    %399 = vmatpush.msra.mxu0 0.0
    %400 = vmatpush.msra.mxu0 0.0
    %401 = vmatpush.msra.mxu0 0.0
    %402 = vmatpush.msra.mxu0 0.0
    %403 = vmatpush.msra.mxu0 0.0
    %404 = vmatpush.msra.mxu0 0.0
    %405 = vmatpush.msra.mxu0 0.0
    %406 = vmatpush.msra.mxu0 0.0
    %407 = vmatpush.msra.mxu0 0.0
    %408 = vmatpush.msra.mxu0 0.0
    %409 = vmatpush.msra.mxu0 %v389
    %410 = vmatmul.f32.gmra.mxu0 %v392
    %v411 = vpop.f32.mrf.mxu0
    %v412 = vadd.f32 0.0, %v411
    %413 = vdwg.mxu0
    %415 = vrot.lane.b32.xlu0 %v127, 112
    %v416 = vpop.permute.xlu0 %415
    %v419 = vsel %vm186, %v386, 0
    %421 = vmatpush.msra.mxu0 0.0
    %422 = vmatpush.msra.mxu0 0.0
    %423 = vmatpush.msra.mxu0 0.0
    %424 = vmatpush.msra.mxu0 0.0
    %425 = vmatpush.msra.mxu0 0.0
    %426 = vmatpush.msra.mxu0 0.0
    %427 = vmatpush.msra.mxu0 0.0
    %428 = vmatpush.msra.mxu0 0.0
    %429 = vmatpush.msra.mxu0 0.0
    %430 = vmatpush.msra.mxu0 0.0
    %431 = vmatpush.msra.mxu0 0.0
    %432 = vmatpush.msra.mxu0 0.0
    %433 = vmatpush.msra.mxu0 0.0
    %434 = vmatpush.msra.mxu0 0.0
    %435 = vmatpush.msra.mxu0 0.0
    %436 = vmatpush.msra.mxu0 %v416
    %437 = vmatmul.f32.gmra.mxu0 %v419
    %v438 = vpop.f32.mrf.mxu0
    %v439 = vadd.f32 0.0, %v438
    %440 = vdwg.mxu0
    %441 = vrot.lane.b32.xlu0 %v101, 96
    %v442 = vpop.permute.xlu0 %441
    %443 = vrot.lane.b32.xlu0 %v101, 32
    %v444 = vpop.permute.xlu0 %443
    %v445 = vsel %vm132, %v442, 0
    %v447 = vsel %vm132, %v444, 0
    %449 = vmatpush.xpose.msra.mxu0 0.0
    %450 = vmatpush.xpose.msra.mxu0 0.0
    %451 = vmatpush.xpose.msra.mxu0 0.0
    %452 = vmatpush.xpose.msra.mxu0 0.0
    %453 = vmatpush.xpose.msra.mxu0 0.0
    %454 = vmatpush.xpose.msra.mxu0 0.0
    %455 = vmatpush.xpose.msra.mxu0 0.0
    %456 = vmatpush.xpose.msra.mxu0 0.0
    %457 = vmatpush.xpose.msra.mxu0 0.0
    %458 = vmatpush.xpose.msra.mxu0 0.0
    %459 = vmatpush.xpose.msra.mxu0 0.0
    %460 = vmatpush.xpose.msra.mxu0 0.0
    %461 = vmatpush.xpose.msra.mxu0 0.0
    %462 = vmatpush.xpose.msra.mxu0 0.0
    %463 = vmatpush.xpose.msra.mxu0 0.0
    %464 = vmatpush.xpose.msra.mxu0 %v447
    %465 = vmatmul.f32.gmra.mxu0 %v445
    %v466 = vpop.f32.mrf.mxu0
    %v467 = vadd.f32 0.0, %v466
    %468 = vdwg.mxu0
    %469 = vrot.lane.b32.xlu0 %v104, 96
    %v470 = vpop.permute.xlu0 %469
    %471 = vrot.lane.b32.xlu0 %v104, 32
    %v472 = vpop.permute.xlu0 %471
    %v473 = vsel %vm132, %v470, 0
    %v475 = vsel %vm132, %v472, 0
    %477 = vmatpush.xpose.msra.mxu0 0.0
    %478 = vmatpush.xpose.msra.mxu0 0.0
    %479 = vmatpush.xpose.msra.mxu0 0.0
    %480 = vmatpush.xpose.msra.mxu0 0.0
    %481 = vmatpush.xpose.msra.mxu0 0.0
    %482 = vmatpush.xpose.msra.mxu0 0.0
    %483 = vmatpush.xpose.msra.mxu0 0.0
    %484 = vmatpush.xpose.msra.mxu0 0.0
    %485 = vmatpush.xpose.msra.mxu0 0.0
    %486 = vmatpush.xpose.msra.mxu0 0.0
    %487 = vmatpush.xpose.msra.mxu0 0.0
    %488 = vmatpush.xpose.msra.mxu0 0.0
    %489 = vmatpush.xpose.msra.mxu0 0.0
    %490 = vmatpush.xpose.msra.mxu0 0.0
    %491 = vmatpush.xpose.msra.mxu0 0.0
    %492 = vmatpush.xpose.msra.mxu0 %v475
    %493 = vmatmul.f32.gmra.mxu0 %v473
    %v494 = vpop.f32.mrf.mxu0
    %v495 = vadd.f32 0.0, %v494
    %496 = vdwg.mxu0
    %v497 = vmul.f32 %v467, 0.25
    %v498 = vmul.f32 %v495, 0.25
    %v499 = vsel %vm186, %v497, -inf
    %500 = vmax.xlane.f32.xlu0 %v499
    %v501 = vpop.xlane.xlu0 %500
    %v502 = vsel %vm186, %v498, -inf
    %503 = vmax.xlane.f32.xlu0 %v502
    %v504 = vpop.xlane.xlu0 %503
    %v505 = vsub.f32 %v497, %v501
    %v506 = vsub.f32 %v498, %v504
    %v507 = vmul.f32 %v505, 1.442695
    %v508 = vpow.pop %v507
    %v509 = vmul.f32 %v506, 1.442695
    %v510 = vpow.pop %v509
    %v511 = vsel %vm186, %v508, 0.0
    %512 = vadd.xlane.f32.xlu0 %v511
    %v513 = vpop.xlane.xlu0 %512
    %v514 = vsel %vm186, %v510, 0.0
    %515 = vadd.xlane.f32.xlu0 %v514
    %v516 = vpop.xlane.xlu0 %515
    %v517 = vrcp.pop %v513
    %v518 = vmul.f32 %v513, %v517
    %v519 = vsub.f32 1.0, %v518
    %v520 = vmul.f32 %v517, %v519
    %v521 = vadd.f32 %v517, %v520
    %vm522 = vweird.f32 %v513
    %vm523 = vweird.f32 %v517
    %vm524 = vmor %vm522, %vm523
    %v525 = vsel %vm524, %v517, %v521
    %v526 = vand.u32 2147483647, %v513
    %vm527 = vcmp.eq.f32.partialorder %v526, 8.507059e+37
    %v528 = vand.u32 %v513, 2147483648
    %v529 = vor.u32 1.1754944e-38, %v528
    %v530 = vsel %vm527, %v529, %v525
    %v531 = vmul.f32 %v508, %v530
    %v532 = vrcp.pop %v516
    %v533 = vmul.f32 %v516, %v532
    %v534 = vsub.f32 1.0, %v533
    %v535 = vmul.f32 %v532, %v534
    %v536 = vadd.f32 %v532, %v535
    %vm537 = vweird.f32 %v516
    %vm538 = vweird.f32 %v532
    %vm539 = vmor %vm537, %vm538
    %v540 = vsel %vm539, %v532, %v536
    %v541 = vand.u32 2147483647, %v516
    %vm542 = vcmp.eq.f32.partialorder %v541, 8.507059e+37
    %v543 = vand.u32 %v516, 2147483648
    %v544 = vor.u32 1.1754944e-38, %v543
    %v545 = vsel %vm542, %v544, %v540
    %v546 = vmul.f32 %v510, %v545
    %547 = vrot.lane.b32.xlu0 %v124, 96
    %v548 = vpop.permute.xlu0 %547
    %v551 = vsel %vm186, %v531, 0
    %553 = vmatpush.msra.mxu0 0.0
    %554 = vmatpush.msra.mxu0 0.0
    %555 = vmatpush.msra.mxu0 0.0
    %556 = vmatpush.msra.mxu0 0.0
    %557 = vmatpush.msra.mxu0 0.0
    %558 = vmatpush.msra.mxu0 0.0
    %559 = vmatpush.msra.mxu0 0.0
    %560 = vmatpush.msra.mxu0 0.0
    %561 = vmatpush.msra.mxu0 0.0
    %562 = vmatpush.msra.mxu0 0.0
    %563 = vmatpush.msra.mxu0 0.0
    %564 = vmatpush.msra.mxu0 0.0
    %565 = vmatpush.msra.mxu0 0.0
    %566 = vmatpush.msra.mxu0 0.0
    %567 = vmatpush.msra.mxu0 0.0
    %568 = vmatpush.msra.mxu0 %v548
    %569 = vmatmul.f32.gmra.mxu0 %v551
    %v570 = vpop.f32.mrf.mxu0
    %v571 = vadd.f32 0.0, %v570
    %572 = vdwg.mxu0
    %573 = vrot.lane.b32.xlu0 %v127, 96
    %v574 = vpop.permute.xlu0 %573
    %v577 = vsel %vm186, %v546, 0
    %579 = vmatpush.msra.mxu0 0.0
    %580 = vmatpush.msra.mxu0 0.0
    %581 = vmatpush.msra.mxu0 0.0
    %582 = vmatpush.msra.mxu0 0.0
    %583 = vmatpush.msra.mxu0 0.0
    %584 = vmatpush.msra.mxu0 0.0
    %585 = vmatpush.msra.mxu0 0.0
    %586 = vmatpush.msra.mxu0 0.0
    %587 = vmatpush.msra.mxu0 0.0
    %588 = vmatpush.msra.mxu0 0.0
    %589 = vmatpush.msra.mxu0 0.0
    %590 = vmatpush.msra.mxu0 0.0
    %591 = vmatpush.msra.mxu0 0.0
    %592 = vmatpush.msra.mxu0 0.0
    %593 = vmatpush.msra.mxu0 0.0
    %594 = vmatpush.msra.mxu0 %v574
    %595 = vmatmul.f32.gmra.mxu0 %v577
    %v596 = vpop.f32.mrf.mxu0
    %v597 = vadd.f32 0.0, %v596
    %598 = vdwg.mxu0
    %599 = vrot.lane.b32.xlu0 %v101, 80
    %v600 = vpop.permute.xlu0 %599
    %601 = vrot.lane.b32.xlu0 %v101, 16
    %v602 = vpop.permute.xlu0 %601
    %v603 = vsel %vm132, %v600, 0
    %v605 = vsel %vm132, %v602, 0
    %607 = vmatpush.xpose.msra.mxu0 0.0
    %608 = vmatpush.xpose.msra.mxu0 0.0
    %609 = vmatpush.xpose.msra.mxu0 0.0
    %610 = vmatpush.xpose.msra.mxu0 0.0
    %611 = vmatpush.xpose.msra.mxu0 0.0
    %612 = vmatpush.xpose.msra.mxu0 0.0
    %613 = vmatpush.xpose.msra.mxu0 0.0
    %614 = vmatpush.xpose.msra.mxu0 0.0
    %615 = vmatpush.xpose.msra.mxu0 0.0
    %616 = vmatpush.xpose.msra.mxu0 0.0
    %617 = vmatpush.xpose.msra.mxu0 0.0
    %618 = vmatpush.xpose.msra.mxu0 0.0
    %619 = vmatpush.xpose.msra.mxu0 0.0
    %620 = vmatpush.xpose.msra.mxu0 0.0
    %621 = vmatpush.xpose.msra.mxu0 0.0
    %622 = vmatpush.xpose.msra.mxu0 %v605
    %623 = vmatmul.f32.gmra.mxu0 %v603
    %v624 = vpop.f32.mrf.mxu0
    %v625 = vadd.f32 0.0, %v624
    %626 = vdwg.mxu0
    %627 = vrot.lane.b32.xlu0 %v104, 80
    %v628 = vpop.permute.xlu0 %627
    %629 = vrot.lane.b32.xlu0 %v104, 16
    %v630 = vpop.permute.xlu0 %629
    %v631 = vsel %vm132, %v628, 0
    %v633 = vsel %vm132, %v630, 0
    %635 = vmatpush.xpose.msra.mxu0 0.0
    %636 = vmatpush.xpose.msra.mxu0 0.0
    %637 = vmatpush.xpose.msra.mxu0 0.0
    %638 = vmatpush.xpose.msra.mxu0 0.0
    %639 = vmatpush.xpose.msra.mxu0 0.0
    %640 = vmatpush.xpose.msra.mxu0 0.0
    %641 = vmatpush.xpose.msra.mxu0 0.0
    %642 = vmatpush.xpose.msra.mxu0 0.0
    %643 = vmatpush.xpose.msra.mxu0 0.0
    %644 = vmatpush.xpose.msra.mxu0 0.0
    %645 = vmatpush.xpose.msra.mxu0 0.0
    %646 = vmatpush.xpose.msra.mxu0 0.0
    %647 = vmatpush.xpose.msra.mxu0 0.0
    %648 = vmatpush.xpose.msra.mxu0 0.0
    %649 = vmatpush.xpose.msra.mxu0 0.0
    %650 = vmatpush.xpose.msra.mxu0 %v633
    %651 = vmatmul.f32.gmra.mxu0 %v631
    %v652 = vpop.f32.mrf.mxu0
    %v653 = vadd.f32 0.0, %v652
    %654 = vdwg.mxu0
    %v655 = vmul.f32 %v625, 0.25
    %v656 = vmul.f32 %v653, 0.25
    %v657 = vsel %vm186, %v655, -inf
    %658 = vmax.xlane.f32.xlu0 %v657
    %v659 = vpop.xlane.xlu0 %658
    %v660 = vsel %vm186, %v656, -inf
    %661 = vmax.xlane.f32.xlu0 %v660
    %v662 = vpop.xlane.xlu0 %661
    %v663 = vsub.f32 %v655, %v659
    %v664 = vsub.f32 %v656, %v662
    %v665 = vmul.f32 %v663, 1.442695
    %v666 = vpow.pop %v665
    %v667 = vmul.f32 %v664, 1.442695
    %v668 = vpow.pop %v667
    %v669 = vsel %vm186, %v666, 0.0
    %670 = vadd.xlane.f32.xlu0 %v669
    %v671 = vpop.xlane.xlu0 %670
    %v672 = vsel %vm186, %v668, 0.0
    %673 = vadd.xlane.f32.xlu0 %v672
    %v674 = vpop.xlane.xlu0 %673
    %v675 = vrcp.pop %v671
    %v676 = vmul.f32 %v671, %v675
    %v677 = vsub.f32 1.0, %v676
    %v678 = vmul.f32 %v675, %v677
    %v679 = vadd.f32 %v675, %v678
    %vm680 = vweird.f32 %v671
    %vm681 = vweird.f32 %v675
    %vm682 = vmor %vm680, %vm681
    %v683 = vsel %vm682, %v675, %v679
    %v684 = vand.u32 2147483647, %v671
    %vm685 = vcmp.eq.f32.partialorder %v684, 8.507059e+37
    %v686 = vand.u32 %v671, 2147483648
    %v687 = vor.u32 1.1754944e-38, %v686
    %v688 = vsel %vm685, %v687, %v683
    %v689 = vmul.f32 %v666, %v688
    %v690 = vrcp.pop %v674
    %v691 = vmul.f32 %v674, %v690
    %v692 = vsub.f32 1.0, %v691
    %v693 = vmul.f32 %v690, %v692
    %v694 = vadd.f32 %v690, %v693
    %vm695 = vweird.f32 %v674
    %vm696 = vweird.f32 %v690
    %vm697 = vmor %vm695, %vm696
    %v698 = vsel %vm697, %v690, %v694
    %v699 = vand.u32 2147483647, %v674
    %vm700 = vcmp.eq.f32.partialorder %v699, 8.507059e+37
    %v701 = vand.u32 %v674, 2147483648
    %v702 = vor.u32 1.1754944e-38, %v701
    %v703 = vsel %vm700, %v702, %v698
    %v704 = vmul.f32 %v668, %v703
    %705 = vrot.lane.b32.xlu0 %v124, 80
    %v706 = vpop.permute.xlu0 %705
    %v709 = vsel %vm186, %v689, 0
    %711 = vmatpush.msra.mxu0 0.0
    %712 = vmatpush.msra.mxu0 0.0
    %713 = vmatpush.msra.mxu0 0.0
    %714 = vmatpush.msra.mxu0 0.0
    %715 = vmatpush.msra.mxu0 0.0
    %716 = vmatpush.msra.mxu0 0.0
    %717 = vmatpush.msra.mxu0 0.0
    %718 = vmatpush.msra.mxu0 0.0
    %719 = vmatpush.msra.mxu0 0.0
    %720 = vmatpush.msra.mxu0 0.0
    %721 = vmatpush.msra.mxu0 0.0
    %722 = vmatpush.msra.mxu0 0.0
    %723 = vmatpush.msra.mxu0 0.0
    %724 = vmatpush.msra.mxu0 0.0
    %725 = vmatpush.msra.mxu0 0.0
    %726 = vmatpush.msra.mxu0 %v706
    %727 = vmatmul.f32.gmra.mxu0 %v709
    %v728 = vpop.f32.mrf.mxu0
    %v729 = vadd.f32 0.0, %v728
    %730 = vdwg.mxu0
    %731 = vrot.lane.b32.xlu0 %v127, 80
    %v732 = vpop.permute.xlu0 %731
    %v735 = vsel %vm186, %v704, 0
    %737 = vmatpush.msra.mxu0 0.0
    %738 = vmatpush.msra.mxu0 0.0
    %739 = vmatpush.msra.mxu0 0.0
    %740 = vmatpush.msra.mxu0 0.0
    %741 = vmatpush.msra.mxu0 0.0
    %742 = vmatpush.msra.mxu0 0.0
    %743 = vmatpush.msra.mxu0 0.0
    %744 = vmatpush.msra.mxu0 0.0
    %745 = vmatpush.msra.mxu0 0.0
    %746 = vmatpush.msra.mxu0 0.0
    %747 = vmatpush.msra.mxu0 0.0
    %748 = vmatpush.msra.mxu0 0.0
    %749 = vmatpush.msra.mxu0 0.0
    %750 = vmatpush.msra.mxu0 0.0
    %751 = vmatpush.msra.mxu0 0.0
    %752 = vmatpush.msra.mxu0 %v732
    %753 = vmatmul.f32.gmra.mxu0 %v735
    %v754 = vpop.f32.mrf.mxu0
    %v755 = vadd.f32 0.0, %v754
    %756 = vdwg.mxu0
    %759 = vrot.lane.b32.xlu0 %v412, 16
    %v760 = vpop.permute.xlu0 %759
    %761 = vrot.lane.b32.xlu0 %v439, 16
    %v762 = vpop.permute.xlu0 %761
    %767 = vrot.lane.b32.xlu0 %v571, 32
    %v768 = vpop.permute.xlu0 %767
    %769 = vrot.lane.b32.xlu0 %v597, 32
    %v770 = vpop.permute.xlu0 %769
    %775 = vrot.lane.b32.xlu0 %v729, 48
    %v776 = vpop.permute.xlu0 %775
    %777 = vrot.lane.b32.xlu0 %v755, 48
    %v778 = vpop.permute.xlu0 %777
    %v781 = vsel %vm132, %v256, %v760
    %v782 = vsel %vm132, %v279, %v762
    %vm783 = vcmask 261120
    %v784 = vsel %vm783, %v781, %v768
    %v785 = vsel %vm783, %v782, %v770
    %vm786 = vcmask 392192
    %v787 = vsel %vm786, %v784, %v776
    %v788 = vsel %vm786, %v785, %v778
    %v789 = vld [vmem:[%s1 + $0x90] sm:$0xff]
    %v790 = vld [vmem:[%s1 + $0xa0] sm:$0xff]
    %v791 = vld [vmem:[%s1 + $0xb0] sm:$0xff]
    %v792 = vld [vmem:[%s1 + $0xc0] sm:$0xff]
    %v793 = vld [vmem:[%s1 + $0xd0] sm:$0xff]
    %v794 = vld [vmem:[%s1 + $0xe0] sm:$0xff]
    %v795 = vld [vmem:[%s1 + $0xf0] sm:$0xff]
    %v796 = vld [vmem:[%s1 + $0x100] sm:$0xff]
    %v797 = vld [vmem:[%s1 + $0x592] ss:$0 sm:$0xff]
    %v799 = vsel %vm76, %v787, 0
    %v802 = vsel %vm76, %v788, 0
    %804 = vmatpush.msra.mxu0 0.0
    %805 = vmatpush.msra.mxu0 0.0
    %806 = vmatpush.msra.mxu0 0.0
    %807 = vmatpush.msra.mxu0 0.0
    %808 = vmatpush.msra.mxu0 0.0
    %809 = vmatpush.msra.mxu0 0.0
    %810 = vmatpush.msra.mxu0 0.0
    %811 = vmatpush.msra.mxu0 0.0
    %812 = vmatpush.msra.mxu0 %v796
    %813 = vmatpush.msra.mxu0 %v795
    %814 = vmatpush.msra.mxu0 %v794
    %815 = vmatpush.msra.mxu0 %v793
    %816 = vmatpush.msra.mxu0 %v792
    %817 = vmatpush.msra.mxu0 %v791
    %818 = vmatpush.msra.mxu0 %v790
    %819 = vmatpush.msra.mxu0 %v789
    %820 = vmatmul.f32.gmra.mxu0 %v799
    %v821 = vpop.f32.mrf.mxu0
    %v822 = vadd.f32 %v797, %v821
    %823 = vmatmul.f32.gmra.mxu0 %v802
    %v824 = vpop.f32.mrf.mxu0
    %v825 = vadd.f32 %v797, %v824
    %826 = vdwg.mxu0
    %v827 = vld [vmem:[%s1 + $0x593] ss:$0 sm:$0xff]
    %v828 = vld [vmem:[%s1 + $0x594] ss:$0 sm:$0xff]
    %v829 = vadd.f32 %v51, %v822
    %v830 = vadd.f32 %v52, %v825
    %v831 = vsel %vm76, %v829, 0.0
    %832 = vadd.xlane.f32.xlu0 %v831
    %v833 = vpop.xlane.xlu0 %832
    %v834 = vsel %vm76, %v830, 0.0
    %835 = vadd.xlane.f32.xlu0 %v834
    %v836 = vpop.xlane.xlu0 %835
    %v837 = vrcp.pop 64.0
    %v838 = vmul.f32 64.0, %v837
    %v839 = vsub.f32 1.0, %v838
    %v840 = vmul.f32 %v837, %v839
    %v841 = vadd.f32 %v837, %v840
    %vm842 = vweird.f32 %v837
    %v843 = vsel %vm842, %v837, %v841
    %v844 = vmul.f32 %v833, %v843
    %v845 = vmul.f32 %v836, %v843
    %v846 = vsub.f32 %v829, %v844
    %v847 = vsub.f32 %v830, %v845
    %v848 = vmul.f32 %v846, %v846
    %v849 = vmul.f32 %v847, %v847
    %v850 = vsel %vm76, %v848, 0.0
    %851 = vadd.xlane.f32.xlu0 %v850
    %v852 = vpop.xlane.xlu0 %851
    %v853 = vsel %vm76, %v849, 0.0
    %854 = vadd.xlane.f32.xlu0 %v853
    %v855 = vpop.xlane.xlu0 %854
    %v856 = vmul.f32 %v852, %v843
    %v857 = vmul.f32 %v855, %v843
    %v858 = vadd.f32 %v856, 1e-05
    %v859 = vadd.f32 %v857, 1e-05
    %v860 = vrsqrt.pop %v858
    %v861 = vmul.f32 %v860, %v858
    %v862 = vmul.f32 %v861, %v860
    %v863 = vmul.f32 0.5, %v862
    %v864 = vsub.f32 1.5, %v863
    %v865 = vmul.f32 %v860, %v864
    %vm866 = vweird.f32 %v858
    %vm867 = vweird.f32 %v860
    %vm868 = vmor %vm866, %vm867
    %v869 = vsel %vm868, %v860, %v865
    %v870 = vrsqrt.pop %v859
    %v871 = vmul.f32 %v870, %v859
    %v872 = vmul.f32 %v871, %v870
    %v873 = vmul.f32 0.5, %v872
    %v874 = vsub.f32 1.5, %v873
    %v875 = vmul.f32 %v870, %v874
    %vm876 = vweird.f32 %v859
    %vm877 = vweird.f32 %v870
    %vm878 = vmor %vm876, %vm877
    %v879 = vsel %vm878, %v870, %v875
    %v880 = vmul.f32 %v846, %v869
    %v881 = vmul.f32 %v847, %v879
    %v882 = vmul.f32 %v880, %v827
    %v883 = vmul.f32 %v881, %v827
    %v884 = vadd.f32 %v882, %v828
    %v885 = vadd.f32 %v883, %v828
    %v886 = vld [vmem:[%s1 + $0x110] sm:$0xff]
    %v887 = vld [vmem:[%s1 + $0x120] sm:$0xff]
    %v888 = vld [vmem:[%s1 + $0x130] sm:$0xff]
    %v889 = vld [vmem:[%s1 + $0x140] sm:$0xff]
    %v890 = vld [vmem:[%s1 + $0x150] sm:$0xff]
    %v891 = vld [vmem:[%s1 + $0x160] sm:$0xff]
    %v892 = vld [vmem:[%s1 + $0x170] sm:$0xff]
    %v893 = vld [vmem:[%s1 + $0x180] sm:$0xff]
    %v894 = vld [vmem:[%s1 + $0x595] ss:$0 sm:$0xff]
    %v896 = vsel %vm76, %v884, 0
    %v899 = vsel %vm76, %v885, 0
    %901 = vmatpush.msra.mxu0 0.0
    %902 = vmatpush.msra.mxu0 0.0
    %903 = vmatpush.msra.mxu0 0.0
    %904 = vmatpush.msra.mxu0 0.0
    %905 = vmatpush.msra.mxu0 0.0
    %906 = vmatpush.msra.mxu0 0.0
    %907 = vmatpush.msra.mxu0 0.0
    %908 = vmatpush.msra.mxu0 0.0
    %909 = vmatpush.msra.mxu0 %v893
    %910 = vmatpush.msra.mxu0 %v892
    %911 = vmatpush.msra.mxu0 %v891
    %912 = vmatpush.msra.mxu0 %v890
    %913 = vmatpush.msra.mxu0 %v889
    %914 = vmatpush.msra.mxu0 %v888
    %915 = vmatpush.msra.mxu0 %v887
    %916 = vmatpush.msra.mxu0 %v886
    %917 = vmatmul.f32.gmra.mxu0 %v896
    %v918 = vpop.f32.mrf.mxu0
    %v919 = vadd.f32 %v894, %v918
    %920 = vmatmul.f32.gmra.mxu0 %v899
    %v921 = vpop.f32.mrf.mxu0
    %v922 = vadd.f32 %v894, %v921
    %923 = vdwg.mxu0
    %v924 = vmax.f32 %v919, 0.0
    %v925 = vmax.f32 %v922, 0.0
    %v926 = vld [vmem:[%s1 + $0x190] sm:$0xff]
    %v927 = vld [vmem:[%s1 + $0x1a0] sm:$0xff]
    %v928 = vld [vmem:[%s1 + $0x1b0] sm:$0xff]
    %v929 = vld [vmem:[%s1 + $0x1c0] sm:$0xff]
    %v930 = vld [vmem:[%s1 + $0x1d0] sm:$0xff]
    %v931 = vld [vmem:[%s1 + $0x1e0] sm:$0xff]
    %v932 = vld [vmem:[%s1 + $0x1f0] sm:$0xff]
    %v933 = vld [vmem:[%s1 + $0x200] sm:$0xff]
    %v934 = vld [vmem:[%s1 + $0x210] sm:$0xff]
    %v935 = vld [vmem:[%s1 + $0x220] sm:$0xff]
    %v936 = vld [vmem:[%s1 + $0x230] sm:$0xff]
    %v937 = vld [vmem:[%s1 + $0x240] sm:$0xff]
    %v938 = vld [vmem:[%s1 + $0x250] sm:$0xff]
    %v939 = vld [vmem:[%s1 + $0x260] sm:$0xff]
    %v940 = vld [vmem:[%s1 + $0x270] sm:$0xff]
    %v941 = vld [vmem:[%s1 + $0x280] sm:$0xff]
    %v942 = vld [vmem:[%s1 + $0x596] ss:$0 sm:$0xff]
    %943 = vmatpush.msra.mxu0 %v941
    %944 = vmatpush.msra.mxu0 %v940
    %945 = vmatpush.msra.mxu0 %v939
    %946 = vmatpush.msra.mxu0 %v938
    %947 = vmatpush.msra.mxu0 %v937
    %948 = vmatpush.msra.mxu0 %v936
    %949 = vmatpush.msra.mxu0 %v935
    %950 = vmatpush.msra.mxu0 %v934
    %951 = vmatpush.msra.mxu0 %v933
    %952 = vmatpush.msra.mxu0 %v932
    %953 = vmatpush.msra.mxu0 %v931
    %954 = vmatpush.msra.mxu0 %v930
    %955 = vmatpush.msra.mxu0 %v929
    %956 = vmatpush.msra.mxu0 %v928
    %957 = vmatpush.msra.mxu0 %v927
    %958 = vmatpush.msra.mxu0 %v926
    %959 = vmatmul.f32.gmra.mxu0 %v924
    %v960 = vpop.f32.mrf.mxu0
    %v961 = vadd.f32 %v942, %v960
    %962 = vmatmul.f32.gmra.mxu0 %v925
    %v963 = vpop.f32.mrf.mxu0
    %v964 = vadd.f32 %v942, %v963
    %965 = vdwg.mxu0
    %v966 = vld [vmem:[%s1 + $0x597] ss:$0 sm:$0xff]
    %v967 = vld [vmem:[%s1 + $0x5a0] ss:$0 sm:$0xff]
    %v968 = vadd.f32 %v884, %v961
    %v969 = vadd.f32 %v885, %v964
    %v970 = vsel %vm76, %v968, 0.0
    %971 = vadd.xlane.f32.xlu0 %v970
    %v972 = vpop.xlane.xlu0 %971
    %v973 = vsel %vm76, %v969, 0.0
    %974 = vadd.xlane.f32.xlu0 %v973
    %v975 = vpop.xlane.xlu0 %974
    %v976 = vmul.f32 %v972, %v843
    %v977 = vmul.f32 %v975, %v843
    %v978 = vsub.f32 %v968, %v976
    %v979 = vsub.f32 %v969, %v977
    %v980 = vmul.f32 %v978, %v978
    %v981 = vmul.f32 %v979, %v979
    %v982 = vsel %vm76, %v980, 0.0
    %983 = vadd.xlane.f32.xlu0 %v982
    %v984 = vpop.xlane.xlu0 %983
    %v985 = vsel %vm76, %v981, 0.0
    %986 = vadd.xlane.f32.xlu0 %v985
    %v987 = vpop.xlane.xlu0 %986
    %v988 = vmul.f32 %v984, %v843
    %v989 = vmul.f32 %v987, %v843
    %v990 = vadd.f32 %v988, 1e-05
    %v991 = vadd.f32 %v989, 1e-05
    %v992 = vrsqrt.pop %v990
    %v993 = vmul.f32 %v992, %v990
    %v994 = vmul.f32 %v993, %v992
    %v995 = vmul.f32 0.5, %v994
    %v996 = vsub.f32 1.5, %v995
    %v997 = vmul.f32 %v992, %v996
    %vm998 = vweird.f32 %v990
    %vm999 = vweird.f32 %v992
    %vm1000 = vmor %vm998, %vm999
    %v1001 = vsel %vm1000, %v992, %v997
    %v1002 = vrsqrt.pop %v991
    %v1003 = vmul.f32 %v1002, %v991
    %v1004 = vmul.f32 %v1003, %v1002
    %v1005 = vmul.f32 0.5, %v1004
    %v1006 = vsub.f32 1.5, %v1005
    %v1007 = vmul.f32 %v1002, %v1006
    %vm1008 = vweird.f32 %v991
    %vm1009 = vweird.f32 %v1002
    %vm1010 = vmor %vm1008, %vm1009
    %v1011 = vsel %vm1010, %v1002, %v1007
    %v1012 = vmul.f32 %v978, %v1001
    %v1013 = vmul.f32 %v979, %v1011
    %v1014 = vmul.f32 %v1012, %v966
    %v1015 = vmul.f32 %v1013, %v966
    %v1016 = vadd.f32 %v1014, %v967
    %v1017 = vadd.f32 %v1015, %v967
    %v1018 = vld [vmem:[%s1 + $0x290] sm:$0xff]
    %v1019 = vld [vmem:[%s1 + $0x298] sm:$0xff]
    %v1020 = vld [vmem:[%s1 + $0x2a0] sm:$0xff]
    %v1021 = vld [vmem:[%s1 + $0x2a8] sm:$0xff]
    %v1022 = vld [vmem:[%s1 + $0x2b0] sm:$0xff]
    %v1023 = vld [vmem:[%s1 + $0x2b8] sm:$0xff]
    %v1024 = vld [vmem:[%s1 + $0x2c0] sm:$0xff]
    %v1025 = vld [vmem:[%s1 + $0x2c8] sm:$0xff]
    %v1026 = vld [vmem:[%s1 + $0x2d0] sm:$0xff]
    %v1027 = vld [vmem:[%s1 + $0x2d8] sm:$0xff]
    %v1028 = vld [vmem:[%s1 + $0x2e0] sm:$0xff]
    %v1029 = vld [vmem:[%s1 + $0x2e8] sm:$0xff]
    %v1030 = vld [vmem:[%s1 + $0x2f0] sm:$0xff]
    %v1031 = vld [vmem:[%s1 + $0x2f8] sm:$0xff]
    %v1032 = vld [vmem:[%s1 + $0x300] sm:$0xff]
    %v1033 = vld [vmem:[%s1 + $0x308] sm:$0xff]
    %s1034 = scalar_lea.vmem %s1, 1441
    %v1035 = vld [vmem:[%s1034] ss:$8 sm:$0x3]
    %v1037 = vperm.slane %v1035, 0
    %v1038 = vperm.slane %v1035, 1
    %v1042 = vsel %vm76, %v1016, 0
    %v1045 = vsel %vm76, %v1017, 0
    %1047 = vmatpush.msra.mxu0 0.0
    %1048 = vmatpush.msra.mxu0 0.0
    %1049 = vmatpush.msra.mxu0 0.0
    %1050 = vmatpush.msra.mxu0 0.0
    %1051 = vmatpush.msra.mxu0 0.0
    %1052 = vmatpush.msra.mxu0 0.0
    %1053 = vmatpush.msra.mxu0 0.0
    %1054 = vmatpush.msra.mxu0 0.0
    %1055 = vmatpush.msra.mxu0 %v1032
    %1056 = vmatpush.msra.mxu0 %v1030
    %1057 = vmatpush.msra.mxu0 %v1028
    %1058 = vmatpush.msra.mxu0 %v1026
    %1059 = vmatpush.msra.mxu0 %v1024
    %1060 = vmatpush.msra.mxu0 %v1022
    %1061 = vmatpush.msra.mxu0 %v1020
    %1062 = vmatpush.msra.mxu0 %v1018
    %1063 = vmatmul.f32.gmra.mxu0 %v1042
    %v1064 = vpop.f32.mrf.mxu0
    %v1065 = vadd.f32 %v1037, %v1064
    %1066 = vmatmul.f32.gmra.mxu0 %v1045
    %v1067 = vpop.f32.mrf.mxu0
    %v1068 = vadd.f32 %v1037, %v1067
    %1069 = vdwg.mxu0
    %1070 = vmatpush.msra.mxu0 0.0
    %1071 = vmatpush.msra.mxu0 0.0
    %1072 = vmatpush.msra.mxu0 0.0
    %1073 = vmatpush.msra.mxu0 0.0
    %1074 = vmatpush.msra.mxu0 0.0
    %1075 = vmatpush.msra.mxu0 0.0
    %1076 = vmatpush.msra.mxu0 0.0
    %1077 = vmatpush.msra.mxu0 0.0
    %1078 = vmatpush.msra.mxu0 %v1033
    %1079 = vmatpush.msra.mxu0 %v1031
    %1080 = vmatpush.msra.mxu0 %v1029
    %1081 = vmatpush.msra.mxu0 %v1027
    %1082 = vmatpush.msra.mxu0 %v1025
    %1083 = vmatpush.msra.mxu0 %v1023
    %1084 = vmatpush.msra.mxu0 %v1021
    %1085 = vmatpush.msra.mxu0 %v1019
    %1086 = vmatmul.f32.gmra.mxu0 %v1042
    %v1087 = vpop.f32.mrf.mxu0
    %v1088 = vadd.f32 %v1038, %v1087
    %1089 = vmatmul.f32.gmra.mxu0 %v1045
    %v1090 = vpop.f32.mrf.mxu0
    %v1091 = vadd.f32 %v1038, %v1090
    %1092 = vdwg.mxu0
    %1094 = vrot.lane.b32.xlu0 %v1065, 64
    %v1095 = vpop.permute.xlu0 %1094
    %v1096 = vsel %vm132, %v1065, 0
    %v1098 = vsel %vm132, %v1095, 0
    %1100 = vmatpush.xpose.msra.mxu0 0.0
    %1101 = vmatpush.xpose.msra.mxu0 0.0
    %1102 = vmatpush.xpose.msra.mxu0 0.0
    %1103 = vmatpush.xpose.msra.mxu0 0.0
    %1104 = vmatpush.xpose.msra.mxu0 0.0
    %1105 = vmatpush.xpose.msra.mxu0 0.0
    %1106 = vmatpush.xpose.msra.mxu0 0.0
    %1107 = vmatpush.xpose.msra.mxu0 0.0
    %1108 = vmatpush.xpose.msra.mxu0 0.0
    %1109 = vmatpush.xpose.msra.mxu0 0.0
    %1110 = vmatpush.xpose.msra.mxu0 0.0
    %1111 = vmatpush.xpose.msra.mxu0 0.0
    %1112 = vmatpush.xpose.msra.mxu0 0.0
    %1113 = vmatpush.xpose.msra.mxu0 0.0
    %1114 = vmatpush.xpose.msra.mxu0 0.0
    %1115 = vmatpush.xpose.msra.mxu0 %v1098
    %1116 = vmatmul.f32.gmra.mxu0 %v1096
    %v1117 = vpop.f32.mrf.mxu0
    %v1118 = vadd.f32 0.0, %v1117
    %1119 = vdwg.mxu0
    %1121 = vrot.lane.b32.xlu0 %v1068, 64
    %v1122 = vpop.permute.xlu0 %1121
    %v1123 = vsel %vm132, %v1068, 0
    %v1125 = vsel %vm132, %v1122, 0
    %1127 = vmatpush.xpose.msra.mxu0 0.0
    %1128 = vmatpush.xpose.msra.mxu0 0.0
    %1129 = vmatpush.xpose.msra.mxu0 0.0
    %1130 = vmatpush.xpose.msra.mxu0 0.0
    %1131 = vmatpush.xpose.msra.mxu0 0.0
    %1132 = vmatpush.xpose.msra.mxu0 0.0
    %1133 = vmatpush.xpose.msra.mxu0 0.0
    %1134 = vmatpush.xpose.msra.mxu0 0.0
    %1135 = vmatpush.xpose.msra.mxu0 0.0
    %1136 = vmatpush.xpose.msra.mxu0 0.0
    %1137 = vmatpush.xpose.msra.mxu0 0.0
    %1138 = vmatpush.xpose.msra.mxu0 0.0
    %1139 = vmatpush.xpose.msra.mxu0 0.0
    %1140 = vmatpush.xpose.msra.mxu0 0.0
    %1141 = vmatpush.xpose.msra.mxu0 0.0
    %1142 = vmatpush.xpose.msra.mxu0 %v1125
    %1143 = vmatmul.f32.gmra.mxu0 %v1123
    %v1144 = vpop.f32.mrf.mxu0
    %v1145 = vadd.f32 0.0, %v1144
    %1146 = vdwg.mxu0
    %v1147 = vmul.f32 %v1118, 0.25
    %v1148 = vmul.f32 %v1145, 0.25
    %v1149 = vsel %vm186, %v1147, -inf
    %1150 = vmax.xlane.f32.xlu0 %v1149
    %v1151 = vpop.xlane.xlu0 %1150
    %v1152 = vsel %vm186, %v1148, -inf
    %1153 = vmax.xlane.f32.xlu0 %v1152
    %v1154 = vpop.xlane.xlu0 %1153
    %v1155 = vsub.f32 %v1147, %v1151
    %v1156 = vsub.f32 %v1148, %v1154
    %v1157 = vmul.f32 %v1155, 1.442695
    %v1158 = vpow.pop %v1157
    %v1159 = vmul.f32 %v1156, 1.442695
    %v1160 = vpow.pop %v1159
    %v1161 = vsel %vm186, %v1158, 0.0
    %1162 = vadd.xlane.f32.xlu0 %v1161
    %v1163 = vpop.xlane.xlu0 %1162
    %v1164 = vsel %vm186, %v1160, 0.0
    %1165 = vadd.xlane.f32.xlu0 %v1164
    %v1166 = vpop.xlane.xlu0 %1165
    %v1167 = vrcp.pop %v1163
    %v1168 = vmul.f32 %v1163, %v1167
    %v1169 = vsub.f32 1.0, %v1168
    %v1170 = vmul.f32 %v1167, %v1169
    %v1171 = vadd.f32 %v1167, %v1170
    %vm1172 = vweird.f32 %v1163
    %vm1173 = vweird.f32 %v1167
    %vm1174 = vmor %vm1172, %vm1173
    %v1175 = vsel %vm1174, %v1167, %v1171
    %v1176 = vand.u32 2147483647, %v1163
    %vm1177 = vcmp.eq.f32.partialorder %v1176, 8.507059e+37
    %v1178 = vand.u32 %v1163, 2147483648
    %v1179 = vor.u32 1.1754944e-38, %v1178
    %v1180 = vsel %vm1177, %v1179, %v1175
    %v1181 = vmul.f32 %v1158, %v1180
    %v1182 = vrcp.pop %v1166
    %v1183 = vmul.f32 %v1166, %v1182
    %v1184 = vsub.f32 1.0, %v1183
    %v1185 = vmul.f32 %v1182, %v1184
    %v1186 = vadd.f32 %v1182, %v1185
    %vm1187 = vweird.f32 %v1166
    %vm1188 = vweird.f32 %v1182
    %vm1189 = vmor %vm1187, %vm1188
    %v1190 = vsel %vm1189, %v1182, %v1186
    %v1191 = vand.u32 2147483647, %v1166
    %vm1192 = vcmp.eq.f32.partialorder %v1191, 8.507059e+37
    %v1193 = vand.u32 %v1166, 2147483648
    %v1194 = vor.u32 1.1754944e-38, %v1193
    %v1195 = vsel %vm1192, %v1194, %v1190
    %v1196 = vmul.f32 %v1160, %v1195
    %v1198 = vsel %vm186, %v1181, 0
    %1200 = vmatpush.msra.mxu0 0.0
    %1201 = vmatpush.msra.mxu0 0.0
    %1202 = vmatpush.msra.mxu0 0.0
    %1203 = vmatpush.msra.mxu0 0.0
    %1204 = vmatpush.msra.mxu0 0.0
    %1205 = vmatpush.msra.mxu0 0.0
    %1206 = vmatpush.msra.mxu0 0.0
    %1207 = vmatpush.msra.mxu0 0.0
    %1208 = vmatpush.msra.mxu0 0.0
    %1209 = vmatpush.msra.mxu0 0.0
    %1210 = vmatpush.msra.mxu0 0.0
    %1211 = vmatpush.msra.mxu0 0.0
    %1212 = vmatpush.msra.mxu0 0.0
    %1213 = vmatpush.msra.mxu0 0.0
    %1214 = vmatpush.msra.mxu0 0.0
    %1215 = vmatpush.msra.mxu0 %v1088
    %1216 = vmatmul.f32.gmra.mxu0 %v1198
    %v1217 = vpop.f32.mrf.mxu0
    %v1218 = vadd.f32 0.0, %v1217
    %1219 = vdwg.mxu0
    %v1221 = vsel %vm186, %v1196, 0
    %1223 = vmatpush.msra.mxu0 0.0
    %1224 = vmatpush.msra.mxu0 0.0
    %1225 = vmatpush.msra.mxu0 0.0
    %1226 = vmatpush.msra.mxu0 0.0
    %1227 = vmatpush.msra.mxu0 0.0
    %1228 = vmatpush.msra.mxu0 0.0
    %1229 = vmatpush.msra.mxu0 0.0
    %1230 = vmatpush.msra.mxu0 0.0
    %1231 = vmatpush.msra.mxu0 0.0
    %1232 = vmatpush.msra.mxu0 0.0
    %1233 = vmatpush.msra.mxu0 0.0
    %1234 = vmatpush.msra.mxu0 0.0
    %1235 = vmatpush.msra.mxu0 0.0
    %1236 = vmatpush.msra.mxu0 0.0
    %1237 = vmatpush.msra.mxu0 0.0
    %1238 = vmatpush.msra.mxu0 %v1091
    %1239 = vmatmul.f32.gmra.mxu0 %v1221
    %v1240 = vpop.f32.mrf.mxu0
    %v1241 = vadd.f32 0.0, %v1240
    %1242 = vdwg.mxu0
    %1243 = vrot.lane.b32.xlu0 %v1065, 112
    %v1244 = vpop.permute.xlu0 %1243
    %1245 = vrot.lane.b32.xlu0 %v1065, 48
    %v1246 = vpop.permute.xlu0 %1245
    %v1247 = vsel %vm132, %v1244, 0
    %v1249 = vsel %vm132, %v1246, 0
    %1251 = vmatpush.xpose.msra.mxu0 0.0
    %1252 = vmatpush.xpose.msra.mxu0 0.0
    %1253 = vmatpush.xpose.msra.mxu0 0.0
    %1254 = vmatpush.xpose.msra.mxu0 0.0
    %1255 = vmatpush.xpose.msra.mxu0 0.0
    %1256 = vmatpush.xpose.msra.mxu0 0.0
    %1257 = vmatpush.xpose.msra.mxu0 0.0
    %1258 = vmatpush.xpose.msra.mxu0 0.0
    %1259 = vmatpush.xpose.msra.mxu0 0.0
    %1260 = vmatpush.xpose.msra.mxu0 0.0
    %1261 = vmatpush.xpose.msra.mxu0 0.0
    %1262 = vmatpush.xpose.msra.mxu0 0.0
    %1263 = vmatpush.xpose.msra.mxu0 0.0
    %1264 = vmatpush.xpose.msra.mxu0 0.0
    %1265 = vmatpush.xpose.msra.mxu0 0.0
    %1266 = vmatpush.xpose.msra.mxu0 %v1249
    %1267 = vmatmul.f32.gmra.mxu0 %v1247
    %v1268 = vpop.f32.mrf.mxu0
    %v1269 = vadd.f32 0.0, %v1268
    %1270 = vdwg.mxu0
    %1271 = vrot.lane.b32.xlu0 %v1068, 112
    %v1272 = vpop.permute.xlu0 %1271
    %1273 = vrot.lane.b32.xlu0 %v1068, 48
    %v1274 = vpop.permute.xlu0 %1273
    %v1275 = vsel %vm132, %v1272, 0
    %v1277 = vsel %vm132, %v1274, 0
    %1279 = vmatpush.xpose.msra.mxu0 0.0
    %1280 = vmatpush.xpose.msra.mxu0 0.0
    %1281 = vmatpush.xpose.msra.mxu0 0.0
    %1282 = vmatpush.xpose.msra.mxu0 0.0
    %1283 = vmatpush.xpose.msra.mxu0 0.0
    %1284 = vmatpush.xpose.msra.mxu0 0.0
    %1285 = vmatpush.xpose.msra.mxu0 0.0
    %1286 = vmatpush.xpose.msra.mxu0 0.0
    %1287 = vmatpush.xpose.msra.mxu0 0.0
    %1288 = vmatpush.xpose.msra.mxu0 0.0
    %1289 = vmatpush.xpose.msra.mxu0 0.0
    %1290 = vmatpush.xpose.msra.mxu0 0.0
    %1291 = vmatpush.xpose.msra.mxu0 0.0
    %1292 = vmatpush.xpose.msra.mxu0 0.0
    %1293 = vmatpush.xpose.msra.mxu0 0.0
    %1294 = vmatpush.xpose.msra.mxu0 %v1277
    %1295 = vmatmul.f32.gmra.mxu0 %v1275
    %v1296 = vpop.f32.mrf.mxu0
    %v1297 = vadd.f32 0.0, %v1296
    %1298 = vdwg.mxu0
    %v1299 = vmul.f32 %v1269, 0.25
    %v1300 = vmul.f32 %v1297, 0.25
    %v1301 = vsel %vm186, %v1299, -inf
    %1302 = vmax.xlane.f32.xlu0 %v1301
    %v1303 = vpop.xlane.xlu0 %1302
    %v1304 = vsel %vm186, %v1300, -inf
    %1305 = vmax.xlane.f32.xlu0 %v1304
    %v1306 = vpop.xlane.xlu0 %1305
    %v1307 = vsub.f32 %v1299, %v1303
    %v1308 = vsub.f32 %v1300, %v1306
    %v1309 = vmul.f32 %v1307, 1.442695
    %v1310 = vpow.pop %v1309
    %v1311 = vmul.f32 %v1308, 1.442695
    %v1312 = vpow.pop %v1311
    %v1313 = vsel %vm186, %v1310, 0.0
    %1314 = vadd.xlane.f32.xlu0 %v1313
    %v1315 = vpop.xlane.xlu0 %1314
    %v1316 = vsel %vm186, %v1312, 0.0
    %1317 = vadd.xlane.f32.xlu0 %v1316
    %v1318 = vpop.xlane.xlu0 %1317
    %v1319 = vrcp.pop %v1315
    %v1320 = vmul.f32 %v1315, %v1319
    %v1321 = vsub.f32 1.0, %v1320
    %v1322 = vmul.f32 %v1319, %v1321
    %v1323 = vadd.f32 %v1319, %v1322
    %vm1324 = vweird.f32 %v1315
    %vm1325 = vweird.f32 %v1319
    %vm1326 = vmor %vm1324, %vm1325
    %v1327 = vsel %vm1326, %v1319, %v1323
    %v1328 = vand.u32 2147483647, %v1315
    %vm1329 = vcmp.eq.f32.partialorder %v1328, 8.507059e+37
    %v1330 = vand.u32 %v1315, 2147483648
    %v1331 = vor.u32 1.1754944e-38, %v1330
    %v1332 = vsel %vm1329, %v1331, %v1327
    %v1333 = vmul.f32 %v1310, %v1332
    %v1334 = vrcp.pop %v1318
    %v1335 = vmul.f32 %v1318, %v1334
    %v1336 = vsub.f32 1.0, %v1335
    %v1337 = vmul.f32 %v1334, %v1336
    %v1338 = vadd.f32 %v1334, %v1337
    %vm1339 = vweird.f32 %v1318
    %vm1340 = vweird.f32 %v1334
    %vm1341 = vmor %vm1339, %vm1340
    %v1342 = vsel %vm1341, %v1334, %v1338
    %v1343 = vand.u32 2147483647, %v1318
    %vm1344 = vcmp.eq.f32.partialorder %v1343, 8.507059e+37
    %v1345 = vand.u32 %v1318, 2147483648
    %v1346 = vor.u32 1.1754944e-38, %v1345
    %v1347 = vsel %vm1344, %v1346, %v1342
    %v1348 = vmul.f32 %v1312, %v1347
    %1350 = vrot.lane.b32.xlu0 %v1088, 112
    %v1351 = vpop.permute.xlu0 %1350
    %v1354 = vsel %vm186, %v1333, 0
    %1356 = vmatpush.msra.mxu0 0.0
    %1357 = vmatpush.msra.mxu0 0.0
    %1358 = vmatpush.msra.mxu0 0.0
    %1359 = vmatpush.msra.mxu0 0.0
    %1360 = vmatpush.msra.mxu0 0.0
    %1361 = vmatpush.msra.mxu0 0.0
    %1362 = vmatpush.msra.mxu0 0.0
    %1363 = vmatpush.msra.mxu0 0.0
    %1364 = vmatpush.msra.mxu0 0.0
    %1365 = vmatpush.msra.mxu0 0.0
    %1366 = vmatpush.msra.mxu0 0.0
    %1367 = vmatpush.msra.mxu0 0.0
    %1368 = vmatpush.msra.mxu0 0.0
    %1369 = vmatpush.msra.mxu0 0.0
    %1370 = vmatpush.msra.mxu0 0.0
    %1371 = vmatpush.msra.mxu0 %v1351
    %1372 = vmatmul.f32.gmra.mxu0 %v1354
    %v1373 = vpop.f32.mrf.mxu0
    %v1374 = vadd.f32 0.0, %v1373
    %1375 = vdwg.mxu0
    %1377 = vrot.lane.b32.xlu0 %v1091, 112
    %v1378 = vpop.permute.xlu0 %1377
    %v1381 = vsel %vm186, %v1348, 0
    %1383 = vmatpush.msra.mxu0 0.0
    %1384 = vmatpush.msra.mxu0 0.0
    %1385 = vmatpush.msra.mxu0 0.0
    %1386 = vmatpush.msra.mxu0 0.0
    %1387 = vmatpush.msra.mxu0 0.0
    %1388 = vmatpush.msra.mxu0 0.0
    %1389 = vmatpush.msra.mxu0 0.0
    %1390 = vmatpush.msra.mxu0 0.0
    %1391 = vmatpush.msra.mxu0 0.0
    %1392 = vmatpush.msra.mxu0 0.0
    %1393 = vmatpush.msra.mxu0 0.0
    %1394 = vmatpush.msra.mxu0 0.0
    %1395 = vmatpush.msra.mxu0 0.0
    %1396 = vmatpush.msra.mxu0 0.0
    %1397 = vmatpush.msra.mxu0 0.0
    %1398 = vmatpush.msra.mxu0 %v1378
    %1399 = vmatmul.f32.gmra.mxu0 %v1381
    %v1400 = vpop.f32.mrf.mxu0
    %v1401 = vadd.f32 0.0, %v1400
    %1402 = vdwg.mxu0
    %1403 = vrot.lane.b32.xlu0 %v1065, 96
    %v1404 = vpop.permute.xlu0 %1403
    %1405 = vrot.lane.b32.xlu0 %v1065, 32
    %v1406 = vpop.permute.xlu0 %1405
    %v1407 = vsel %vm132, %v1404, 0
    %v1409 = vsel %vm132, %v1406, 0
    %1411 = vmatpush.xpose.msra.mxu0 0.0
    %1412 = vmatpush.xpose.msra.mxu0 0.0
    %1413 = vmatpush.xpose.msra.mxu0 0.0
    %1414 = vmatpush.xpose.msra.mxu0 0.0
    %1415 = vmatpush.xpose.msra.mxu0 0.0
    %1416 = vmatpush.xpose.msra.mxu0 0.0
    %1417 = vmatpush.xpose.msra.mxu0 0.0
    %1418 = vmatpush.xpose.msra.mxu0 0.0
    %1419 = vmatpush.xpose.msra.mxu0 0.0
    %1420 = vmatpush.xpose.msra.mxu0 0.0
    %1421 = vmatpush.xpose.msra.mxu0 0.0
    %1422 = vmatpush.xpose.msra.mxu0 0.0
    %1423 = vmatpush.xpose.msra.mxu0 0.0
    %1424 = vmatpush.xpose.msra.mxu0 0.0
    %1425 = vmatpush.xpose.msra.mxu0 0.0
    %1426 = vmatpush.xpose.msra.mxu0 %v1409
    %1427 = vmatmul.f32.gmra.mxu0 %v1407
    %v1428 = vpop.f32.mrf.mxu0
    %v1429 = vadd.f32 0.0, %v1428
    %1430 = vdwg.mxu0
    %1431 = vrot.lane.b32.xlu0 %v1068, 96
    %v1432 = vpop.permute.xlu0 %1431
    %1433 = vrot.lane.b32.xlu0 %v1068, 32
    %v1434 = vpop.permute.xlu0 %1433
    %v1435 = vsel %vm132, %v1432, 0
    %v1437 = vsel %vm132, %v1434, 0
    %1439 = vmatpush.xpose.msra.mxu0 0.0
    %1440 = vmatpush.xpose.msra.mxu0 0.0
    %1441 = vmatpush.xpose.msra.mxu0 0.0
    %1442 = vmatpush.xpose.msra.mxu0 0.0
    %1443 = vmatpush.xpose.msra.mxu0 0.0
    %1444 = vmatpush.xpose.msra.mxu0 0.0
    %1445 = vmatpush.xpose.msra.mxu0 0.0
    %1446 = vmatpush.xpose.msra.mxu0 0.0
    %1447 = vmatpush.xpose.msra.mxu0 0.0
    %1448 = vmatpush.xpose.msra.mxu0 0.0
    %1449 = vmatpush.xpose.msra.mxu0 0.0
    %1450 = vmatpush.xpose.msra.mxu0 0.0
    %1451 = vmatpush.xpose.msra.mxu0 0.0
    %1452 = vmatpush.xpose.msra.mxu0 0.0
    %1453 = vmatpush.xpose.msra.mxu0 0.0
    %1454 = vmatpush.xpose.msra.mxu0 %v1437
    %1455 = vmatmul.f32.gmra.mxu0 %v1435
    %v1456 = vpop.f32.mrf.mxu0
    %v1457 = vadd.f32 0.0, %v1456
    %1458 = vdwg.mxu0
    %v1459 = vmul.f32 %v1429, 0.25
    %v1460 = vmul.f32 %v1457, 0.25
    %v1461 = vsel %vm186, %v1459, -inf
    %1462 = vmax.xlane.f32.xlu0 %v1461
    %v1463 = vpop.xlane.xlu0 %1462
    %v1464 = vsel %vm186, %v1460, -inf
    %1465 = vmax.xlane.f32.xlu0 %v1464
    %v1466 = vpop.xlane.xlu0 %1465
    %v1467 = vsub.f32 %v1459, %v1463
    %v1468 = vsub.f32 %v1460, %v1466
    %v1469 = vmul.f32 %v1467, 1.442695
    %v1470 = vpow.pop %v1469
    %v1471 = vmul.f32 %v1468, 1.442695
    %v1472 = vpow.pop %v1471
    %v1473 = vsel %vm186, %v1470, 0.0
    %1474 = vadd.xlane.f32.xlu0 %v1473
    %v1475 = vpop.xlane.xlu0 %1474
    %v1476 = vsel %vm186, %v1472, 0.0
    %1477 = vadd.xlane.f32.xlu0 %v1476
    %v1478 = vpop.xlane.xlu0 %1477
    %v1479 = vrcp.pop %v1475
    %v1480 = vmul.f32 %v1475, %v1479
    %v1481 = vsub.f32 1.0, %v1480
    %v1482 = vmul.f32 %v1479, %v1481
    %v1483 = vadd.f32 %v1479, %v1482
    %vm1484 = vweird.f32 %v1475
    %vm1485 = vweird.f32 %v1479
    %vm1486 = vmor %vm1484, %vm1485
    %v1487 = vsel %vm1486, %v1479, %v1483
    %v1488 = vand.u32 2147483647, %v1475
    %vm1489 = vcmp.eq.f32.partialorder %v1488, 8.507059e+37
    %v1490 = vand.u32 %v1475, 2147483648
    %v1491 = vor.u32 1.1754944e-38, %v1490
    %v1492 = vsel %vm1489, %v1491, %v1487
    %v1493 = vmul.f32 %v1470, %v1492
    %v1494 = vrcp.pop %v1478
    %v1495 = vmul.f32 %v1478, %v1494
    %v1496 = vsub.f32 1.0, %v1495
    %v1497 = vmul.f32 %v1494, %v1496
    %v1498 = vadd.f32 %v1494, %v1497
    %vm1499 = vweird.f32 %v1478
    %vm1500 = vweird.f32 %v1494
    %vm1501 = vmor %vm1499, %vm1500
    %v1502 = vsel %vm1501, %v1494, %v1498
    %v1503 = vand.u32 2147483647, %v1478
    %vm1504 = vcmp.eq.f32.partialorder %v1503, 8.507059e+37
    %v1505 = vand.u32 %v1478, 2147483648
    %v1506 = vor.u32 1.1754944e-38, %v1505
    %v1507 = vsel %vm1504, %v1506, %v1502
    %v1508 = vmul.f32 %v1472, %v1507
    %1509 = vrot.lane.b32.xlu0 %v1088, 96
    %v1510 = vpop.permute.xlu0 %1509
    %v1513 = vsel %vm186, %v1493, 0
    %1515 = vmatpush.msra.mxu0 0.0
    %1516 = vmatpush.msra.mxu0 0.0
    %1517 = vmatpush.msra.mxu0 0.0
    %1518 = vmatpush.msra.mxu0 0.0
    %1519 = vmatpush.msra.mxu0 0.0
    %1520 = vmatpush.msra.mxu0 0.0
    %1521 = vmatpush.msra.mxu0 0.0
    %1522 = vmatpush.msra.mxu0 0.0
    %1523 = vmatpush.msra.mxu0 0.0
    %1524 = vmatpush.msra.mxu0 0.0
    %1525 = vmatpush.msra.mxu0 0.0
    %1526 = vmatpush.msra.mxu0 0.0
    %1527 = vmatpush.msra.mxu0 0.0
    %1528 = vmatpush.msra.mxu0 0.0
    %1529 = vmatpush.msra.mxu0 0.0
    %1530 = vmatpush.msra.mxu0 %v1510
    %1531 = vmatmul.f32.gmra.mxu0 %v1513
    %v1532 = vpop.f32.mrf.mxu0
    %v1533 = vadd.f32 0.0, %v1532
    %1534 = vdwg.mxu0
    %1535 = vrot.lane.b32.xlu0 %v1091, 96
    %v1536 = vpop.permute.xlu0 %1535
    %v1539 = vsel %vm186, %v1508, 0
    %1541 = vmatpush.msra.mxu0 0.0
    %1542 = vmatpush.msra.mxu0 0.0
    %1543 = vmatpush.msra.mxu0 0.0
    %1544 = vmatpush.msra.mxu0 0.0
    %1545 = vmatpush.msra.mxu0 0.0
    %1546 = vmatpush.msra.mxu0 0.0
    %1547 = vmatpush.msra.mxu0 0.0
    %1548 = vmatpush.msra.mxu0 0.0
    %1549 = vmatpush.msra.mxu0 0.0
    %1550 = vmatpush.msra.mxu0 0.0
    %1551 = vmatpush.msra.mxu0 0.0
    %1552 = vmatpush.msra.mxu0 0.0
    %1553 = vmatpush.msra.mxu0 0.0
    %1554 = vmatpush.msra.mxu0 0.0
    %1555 = vmatpush.msra.mxu0 0.0
    %1556 = vmatpush.msra.mxu0 %v1536
    %1557 = vmatmul.f32.gmra.mxu0 %v1539
    %v1558 = vpop.f32.mrf.mxu0
    %v1559 = vadd.f32 0.0, %v1558
    %1560 = vdwg.mxu0
    %1561 = vrot.lane.b32.xlu0 %v1065, 80
    %v1562 = vpop.permute.xlu0 %1561
    %1563 = vrot.lane.b32.xlu0 %v1065, 16
    %v1564 = vpop.permute.xlu0 %1563
    %v1565 = vsel %vm132, %v1562, 0
    %v1567 = vsel %vm132, %v1564, 0
    %1569 = vmatpush.xpose.msra.mxu0 0.0
    %1570 = vmatpush.xpose.msra.mxu0 0.0
    %1571 = vmatpush.xpose.msra.mxu0 0.0
    %1572 = vmatpush.xpose.msra.mxu0 0.0
    %1573 = vmatpush.xpose.msra.mxu0 0.0
    %1574 = vmatpush.xpose.msra.mxu0 0.0
    %1575 = vmatpush.xpose.msra.mxu0 0.0
    %1576 = vmatpush.xpose.msra.mxu0 0.0
    %1577 = vmatpush.xpose.msra.mxu0 0.0
    %1578 = vmatpush.xpose.msra.mxu0 0.0
    %1579 = vmatpush.xpose.msra.mxu0 0.0
    %1580 = vmatpush.xpose.msra.mxu0 0.0
    %1581 = vmatpush.xpose.msra.mxu0 0.0
    %1582 = vmatpush.xpose.msra.mxu0 0.0
    %1583 = vmatpush.xpose.msra.mxu0 0.0
    %1584 = vmatpush.xpose.msra.mxu0 %v1567
    %1585 = vmatmul.f32.gmra.mxu0 %v1565
    %v1586 = vpop.f32.mrf.mxu0
    %v1587 = vadd.f32 0.0, %v1586
    %1588 = vdwg.mxu0
    %1589 = vrot.lane.b32.xlu0 %v1068, 80
    %v1590 = vpop.permute.xlu0 %1589
    %1591 = vrot.lane.b32.xlu0 %v1068, 16
    %v1592 = vpop.permute.xlu0 %1591
    %v1593 = vsel %vm132, %v1590, 0
    %v1595 = vsel %vm132, %v1592, 0
    %1597 = vmatpush.xpose.msra.mxu0 0.0
    %1598 = vmatpush.xpose.msra.mxu0 0.0
    %1599 = vmatpush.xpose.msra.mxu0 0.0
    %1600 = vmatpush.xpose.msra.mxu0 0.0
    %1601 = vmatpush.xpose.msra.mxu0 0.0
    %1602 = vmatpush.xpose.msra.mxu0 0.0
    %1603 = vmatpush.xpose.msra.mxu0 0.0
    %1604 = vmatpush.xpose.msra.mxu0 0.0
    %1605 = vmatpush.xpose.msra.mxu0 0.0
    %1606 = vmatpush.xpose.msra.mxu0 0.0
    %1607 = vmatpush.xpose.msra.mxu0 0.0
    %1608 = vmatpush.xpose.msra.mxu0 0.0
    %1609 = vmatpush.xpose.msra.mxu0 0.0
    %1610 = vmatpush.xpose.msra.mxu0 0.0
    %1611 = vmatpush.xpose.msra.mxu0 0.0
    %1612 = vmatpush.xpose.msra.mxu0 %v1595
    %1613 = vmatmul.f32.gmra.mxu0 %v1593
    %v1614 = vpop.f32.mrf.mxu0
    %v1615 = vadd.f32 0.0, %v1614
    %1616 = vdwg.mxu0
    %v1617 = vmul.f32 %v1587, 0.25
    %v1618 = vmul.f32 %v1615, 0.25
    %v1619 = vsel %vm186, %v1617, -inf
    %1620 = vmax.xlane.f32.xlu0 %v1619
    %v1621 = vpop.xlane.xlu0 %1620
    %v1622 = vsel %vm186, %v1618, -inf
    %1623 = vmax.xlane.f32.xlu0 %v1622
    %v1624 = vpop.xlane.xlu0 %1623
    %v1625 = vsub.f32 %v1617, %v1621
    %v1626 = vsub.f32 %v1618, %v1624
    %v1627 = vmul.f32 %v1625, 1.442695
    %v1628 = vpow.pop %v1627
    %v1629 = vmul.f32 %v1626, 1.442695
    %v1630 = vpow.pop %v1629
    %v1631 = vsel %vm186, %v1628, 0.0
    %1632 = vadd.xlane.f32.xlu0 %v1631
    %v1633 = vpop.xlane.xlu0 %1632
    %v1634 = vsel %vm186, %v1630, 0.0
    %1635 = vadd.xlane.f32.xlu0 %v1634
    %v1636 = vpop.xlane.xlu0 %1635
    %v1637 = vrcp.pop %v1633
    %v1638 = vmul.f32 %v1633, %v1637
    %v1639 = vsub.f32 1.0, %v1638
    %v1640 = vmul.f32 %v1637, %v1639
    %v1641 = vadd.f32 %v1637, %v1640
    %vm1642 = vweird.f32 %v1633
    %vm1643 = vweird.f32 %v1637
    %vm1644 = vmor %vm1642, %vm1643
    %v1645 = vsel %vm1644, %v1637, %v1641
    %v1646 = vand.u32 2147483647, %v1633
    %vm1647 = vcmp.eq.f32.partialorder %v1646, 8.507059e+37
    %v1648 = vand.u32 %v1633, 2147483648
    %v1649 = vor.u32 1.1754944e-38, %v1648
    %v1650 = vsel %vm1647, %v1649, %v1645
    %v1651 = vmul.f32 %v1628, %v1650
    %v1652 = vrcp.pop %v1636
    %v1653 = vmul.f32 %v1636, %v1652
    %v1654 = vsub.f32 1.0, %v1653
    %v1655 = vmul.f32 %v1652, %v1654
    %v1656 = vadd.f32 %v1652, %v1655
    %vm1657 = vweird.f32 %v1636
    %vm1658 = vweird.f32 %v1652
    %vm1659 = vmor %vm1657, %vm1658
    %v1660 = vsel %vm1659, %v1652, %v1656
    %v1661 = vand.u32 2147483647, %v1636
    %vm1662 = vcmp.eq.f32.partialorder %v1661, 8.507059e+37
    %v1663 = vand.u32 %v1636, 2147483648
    %v1664 = vor.u32 1.1754944e-38, %v1663
    %v1665 = vsel %vm1662, %v1664, %v1660
    %v1666 = vmul.f32 %v1630, %v1665
    %1667 = vrot.lane.b32.xlu0 %v1088, 80
    %v1668 = vpop.permute.xlu0 %1667
    %v1671 = vsel %vm186, %v1651, 0
    %1673 = vmatpush.msra.mxu0 0.0
    %1674 = vmatpush.msra.mxu0 0.0
    %1675 = vmatpush.msra.mxu0 0.0
    %1676 = vmatpush.msra.mxu0 0.0
    %1677 = vmatpush.msra.mxu0 0.0
    %1678 = vmatpush.msra.mxu0 0.0
    %1679 = vmatpush.msra.mxu0 0.0
    %1680 = vmatpush.msra.mxu0 0.0
    %1681 = vmatpush.msra.mxu0 0.0
    %1682 = vmatpush.msra.mxu0 0.0
    %1683 = vmatpush.msra.mxu0 0.0
    %1684 = vmatpush.msra.mxu0 0.0
    %1685 = vmatpush.msra.mxu0 0.0
    %1686 = vmatpush.msra.mxu0 0.0
    %1687 = vmatpush.msra.mxu0 0.0
    %1688 = vmatpush.msra.mxu0 %v1668
    %1689 = vmatmul.f32.gmra.mxu0 %v1671
    %v1690 = vpop.f32.mrf.mxu0
    %v1691 = vadd.f32 0.0, %v1690
    %1692 = vdwg.mxu0
    %1693 = vrot.lane.b32.xlu0 %v1091, 80
    %v1694 = vpop.permute.xlu0 %1693
    %v1697 = vsel %vm186, %v1666, 0
    %1699 = vmatpush.msra.mxu0 0.0
    %1700 = vmatpush.msra.mxu0 0.0
    %1701 = vmatpush.msra.mxu0 0.0
    %1702 = vmatpush.msra.mxu0 0.0
    %1703 = vmatpush.msra.mxu0 0.0
    %1704 = vmatpush.msra.mxu0 0.0
    %1705 = vmatpush.msra.mxu0 0.0
    %1706 = vmatpush.msra.mxu0 0.0
    %1707 = vmatpush.msra.mxu0 0.0
    %1708 = vmatpush.msra.mxu0 0.0
    %1709 = vmatpush.msra.mxu0 0.0
    %1710 = vmatpush.msra.mxu0 0.0
    %1711 = vmatpush.msra.mxu0 0.0
    %1712 = vmatpush.msra.mxu0 0.0
    %1713 = vmatpush.msra.mxu0 0.0
    %1714 = vmatpush.msra.mxu0 %v1694
    %1715 = vmatmul.f32.gmra.mxu0 %v1697
    %v1716 = vpop.f32.mrf.mxu0
    %v1717 = vadd.f32 0.0, %v1716
    %1718 = vdwg.mxu0
    %1721 = vrot.lane.b32.xlu0 %v1374, 16
    %v1722 = vpop.permute.xlu0 %1721
    %1723 = vrot.lane.b32.xlu0 %v1401, 16
    %v1724 = vpop.permute.xlu0 %1723
    %1729 = vrot.lane.b32.xlu0 %v1533, 32
    %v1730 = vpop.permute.xlu0 %1729
    %1731 = vrot.lane.b32.xlu0 %v1559, 32
    %v1732 = vpop.permute.xlu0 %1731
    %1737 = vrot.lane.b32.xlu0 %v1691, 48
    %v1738 = vpop.permute.xlu0 %1737
    %1739 = vrot.lane.b32.xlu0 %v1717, 48
    %v1740 = vpop.permute.xlu0 %1739
    %v1743 = vsel %vm132, %v1218, %v1722
    %v1744 = vsel %vm132, %v1241, %v1724
    %v1745 = vsel %vm783, %v1743, %v1730
    %v1746 = vsel %vm783, %v1744, %v1732
    %v1747 = vsel %vm786, %v1745, %v1738
    %v1748 = vsel %vm786, %v1746, %v1740
    %v1749 = vld [vmem:[%s1 + $0x310] sm:$0xff]
    %v1750 = vld [vmem:[%s1 + $0x320] sm:$0xff]
    %v1751 = vld [vmem:[%s1 + $0x330] sm:$0xff]
    %v1752 = vld [vmem:[%s1 + $0x340] sm:$0xff]
    %v1753 = vld [vmem:[%s1 + $0x350] sm:$0xff]
    %v1754 = vld [vmem:[%s1 + $0x360] sm:$0xff]
    %v1755 = vld [vmem:[%s1 + $0x370] sm:$0xff]
    %v1756 = vld [vmem:[%s1 + $0x380] sm:$0xff]
    %v1757 = vld [vmem:[%s1 + $0x5a2] ss:$0 sm:$0xff]
    %v1759 = vsel %vm76, %v1747, 0
    %v1762 = vsel %vm76, %v1748, 0
    %1764 = vmatpush.msra.mxu0 0.0
    %1765 = vmatpush.msra.mxu0 0.0
    %1766 = vmatpush.msra.mxu0 0.0
    %1767 = vmatpush.msra.mxu0 0.0
    %1768 = vmatpush.msra.mxu0 0.0
    %1769 = vmatpush.msra.mxu0 0.0
    %1770 = vmatpush.msra.mxu0 0.0
    %1771 = vmatpush.msra.mxu0 0.0
    %1772 = vmatpush.msra.mxu0 %v1756
    %1773 = vmatpush.msra.mxu0 %v1755
    %1774 = vmatpush.msra.mxu0 %v1754
    %1775 = vmatpush.msra.mxu0 %v1753
    %1776 = vmatpush.msra.mxu0 %v1752
    %1777 = vmatpush.msra.mxu0 %v1751
    %1778 = vmatpush.msra.mxu0 %v1750
    %1779 = vmatpush.msra.mxu0 %v1749
    %1780 = vmatmul.f32.gmra.mxu0 %v1759
    %v1781 = vpop.f32.mrf.mxu0
    %v1782 = vadd.f32 %v1757, %v1781
    %1783 = vmatmul.f32.gmra.mxu0 %v1762
    %v1784 = vpop.f32.mrf.mxu0
    %v1785 = vadd.f32 %v1757, %v1784
    %1786 = vdwg.mxu0
    %v1787 = vld [vmem:[%s1 + $0x5a3] ss:$0 sm:$0xff]
    %v1788 = vld [vmem:[%s1 + $0x5a4] ss:$0 sm:$0xff]
    %v1789 = vadd.f32 %v1016, %v1782
    %v1790 = vadd.f32 %v1017, %v1785
    %v1791 = vsel %vm76, %v1789, 0.0
    %1792 = vadd.xlane.f32.xlu0 %v1791
    %v1793 = vpop.xlane.xlu0 %1792
    %v1794 = vsel %vm76, %v1790, 0.0
    %1795 = vadd.xlane.f32.xlu0 %v1794
    %v1796 = vpop.xlane.xlu0 %1795
    %v1797 = vmul.f32 %v1793, %v843
    %v1798 = vmul.f32 %v1796, %v843
    %v1799 = vsub.f32 %v1789, %v1797
    %v1800 = vsub.f32 %v1790, %v1798
    %v1801 = vmul.f32 %v1799, %v1799
    %v1802 = vmul.f32 %v1800, %v1800
    %v1803 = vsel %vm76, %v1801, 0.0
    %1804 = vadd.xlane.f32.xlu0 %v1803
    %v1805 = vpop.xlane.xlu0 %1804
    %v1806 = vsel %vm76, %v1802, 0.0
    %1807 = vadd.xlane.f32.xlu0 %v1806
    %v1808 = vpop.xlane.xlu0 %1807
    %v1809 = vmul.f32 %v1805, %v843
    %v1810 = vmul.f32 %v1808, %v843
    %v1811 = vadd.f32 %v1809, 1e-05
    %v1812 = vadd.f32 %v1810, 1e-05
    %v1813 = vrsqrt.pop %v1811
    %v1814 = vmul.f32 %v1813, %v1811
    %v1815 = vmul.f32 %v1814, %v1813
    %v1816 = vmul.f32 0.5, %v1815
    %v1817 = vsub.f32 1.5, %v1816
    %v1818 = vmul.f32 %v1813, %v1817
    %vm1819 = vweird.f32 %v1811
    %vm1820 = vweird.f32 %v1813
    %vm1821 = vmor %vm1819, %vm1820
    %v1822 = vsel %vm1821, %v1813, %v1818
    %v1823 = vrsqrt.pop %v1812
    %v1824 = vmul.f32 %v1823, %v1812
    %v1825 = vmul.f32 %v1824, %v1823
    %v1826 = vmul.f32 0.5, %v1825
    %v1827 = vsub.f32 1.5, %v1826
    %v1828 = vmul.f32 %v1823, %v1827
    %vm1829 = vweird.f32 %v1812
    %vm1830 = vweird.f32 %v1823
    %vm1831 = vmor %vm1829, %vm1830
    %v1832 = vsel %vm1831, %v1823, %v1828
    %v1833 = vmul.f32 %v1799, %v1822
    %v1834 = vmul.f32 %v1800, %v1832
    %v1835 = vmul.f32 %v1833, %v1787
    %v1836 = vmul.f32 %v1834, %v1787
    %v1837 = vadd.f32 %v1835, %v1788
    %v1838 = vadd.f32 %v1836, %v1788
    %v1839 = vld [vmem:[%s1 + $0x390] sm:$0xff]
    %v1840 = vld [vmem:[%s1 + $0x3a0] sm:$0xff]
    %v1841 = vld [vmem:[%s1 + $0x3b0] sm:$0xff]
    %v1842 = vld [vmem:[%s1 + $0x3c0] sm:$0xff]
    %v1843 = vld [vmem:[%s1 + $0x3d0] sm:$0xff]
    %v1844 = vld [vmem:[%s1 + $0x3e0] sm:$0xff]
    %v1845 = vld [vmem:[%s1 + $0x3f0] sm:$0xff]
    %v1846 = vld [vmem:[%s1 + $0x400] sm:$0xff]
    %v1847 = vld [vmem:[%s1 + $0x5a5] ss:$0 sm:$0xff]
    %v1849 = vsel %vm76, %v1837, 0
    %v1852 = vsel %vm76, %v1838, 0
    %1854 = vmatpush.msra.mxu0 0.0
    %1855 = vmatpush.msra.mxu0 0.0
    %1856 = vmatpush.msra.mxu0 0.0
    %1857 = vmatpush.msra.mxu0 0.0
    %1858 = vmatpush.msra.mxu0 0.0
    %1859 = vmatpush.msra.mxu0 0.0
    %1860 = vmatpush.msra.mxu0 0.0
    %1861 = vmatpush.msra.mxu0 0.0
    %1862 = vmatpush.msra.mxu0 %v1846
    %1863 = vmatpush.msra.mxu0 %v1845
    %1864 = vmatpush.msra.mxu0 %v1844
    %1865 = vmatpush.msra.mxu0 %v1843
    %1866 = vmatpush.msra.mxu0 %v1842
    %1867 = vmatpush.msra.mxu0 %v1841
    %1868 = vmatpush.msra.mxu0 %v1840
    %1869 = vmatpush.msra.mxu0 %v1839
    %1870 = vmatmul.f32.gmra.mxu0 %v1849
    %v1871 = vpop.f32.mrf.mxu0
    %v1872 = vadd.f32 %v1847, %v1871
    %1873 = vmatmul.f32.gmra.mxu0 %v1852
    %v1874 = vpop.f32.mrf.mxu0
    %v1875 = vadd.f32 %v1847, %v1874
    %1876 = vdwg.mxu0
    %v1877 = vmax.f32 %v1872, 0.0
    %v1878 = vmax.f32 %v1875, 0.0
    %v1879 = vld [vmem:[%s1 + $0x410] sm:$0xff]
    %v1880 = vld [vmem:[%s1 + $0x420] sm:$0xff]
    %v1881 = vld [vmem:[%s1 + $0x430] sm:$0xff]
    %v1882 = vld [vmem:[%s1 + $0x440] sm:$0xff]
    %v1883 = vld [vmem:[%s1 + $0x450] sm:$0xff]
    %v1884 = vld [vmem:[%s1 + $0x460] sm:$0xff]
    %v1885 = vld [vmem:[%s1 + $0x470] sm:$0xff]
    %v1886 = vld [vmem:[%s1 + $0x480] sm:$0xff]
    %v1887 = vld [vmem:[%s1 + $0x490] sm:$0xff]
    %v1888 = vld [vmem:[%s1 + $0x4a0] sm:$0xff]
    %v1889 = vld [vmem:[%s1 + $0x4b0] sm:$0xff]
    %v1890 = vld [vmem:[%s1 + $0x4c0] sm:$0xff]
    %v1891 = vld [vmem:[%s1 + $0x4d0] sm:$0xff]
    %v1892 = vld [vmem:[%s1 + $0x4e0] sm:$0xff]
    %v1893 = vld [vmem:[%s1 + $0x4f0] sm:$0xff]
    %v1894 = vld [vmem:[%s1 + $0x500] sm:$0xff]
    %v1895 = vld [vmem:[%s1 + $0x5a6] ss:$0 sm:$0xff]
    %1896 = vmatpush.msra.mxu0 %v1894
    %1897 = vmatpush.msra.mxu0 %v1893
    %1898 = vmatpush.msra.mxu0 %v1892
    %1899 = vmatpush.msra.mxu0 %v1891
    %1900 = vmatpush.msra.mxu0 %v1890
    %1901 = vmatpush.msra.mxu0 %v1889
    %1902 = vmatpush.msra.mxu0 %v1888
    %1903 = vmatpush.msra.mxu0 %v1887
    %1904 = vmatpush.msra.mxu0 %v1886
    %1905 = vmatpush.msra.mxu0 %v1885
    %1906 = vmatpush.msra.mxu0 %v1884
    %1907 = vmatpush.msra.mxu0 %v1883
    %1908 = vmatpush.msra.mxu0 %v1882
    %1909 = vmatpush.msra.mxu0 %v1881
    %1910 = vmatpush.msra.mxu0 %v1880
    %1911 = vmatpush.msra.mxu0 %v1879
    %1912 = vmatmul.f32.gmra.mxu0 %v1877
    %v1913 = vpop.f32.mrf.mxu0
    %v1914 = vadd.f32 %v1895, %v1913
    %1915 = vmatmul.f32.gmra.mxu0 %v1878
    %v1916 = vpop.f32.mrf.mxu0
    %v1917 = vadd.f32 %v1895, %v1916
    %1918 = vdwg.mxu0
    %v1919 = vld [vmem:[%s1 + $0x5a7] ss:$0 sm:$0xff]
    %v1920 = vld [vmem:[%s1 + $0x5b0] ss:$0 sm:$0xff]
    %v1921 = vadd.f32 %v1837, %v1914
    %v1922 = vadd.f32 %v1838, %v1917
    %v1923 = vsel %vm76, %v1921, 0.0
    %1924 = vadd.xlane.f32.xlu0 %v1923
    %v1925 = vpop.xlane.xlu0 %1924
    %v1926 = vsel %vm76, %v1922, 0.0
    %1927 = vadd.xlane.f32.xlu0 %v1926
    %v1928 = vpop.xlane.xlu0 %1927
    %v1929 = vmul.f32 %v1925, %v843
    %v1930 = vmul.f32 %v1928, %v843
    %v1931 = vsub.f32 %v1921, %v1929
    %v1932 = vsub.f32 %v1922, %v1930
    %v1933 = vmul.f32 %v1931, %v1931
    %v1934 = vmul.f32 %v1932, %v1932
    %v1935 = vsel %vm76, %v1933, 0.0
    %1936 = vadd.xlane.f32.xlu0 %v1935
    %v1937 = vpop.xlane.xlu0 %1936
    %v1938 = vsel %vm76, %v1934, 0.0
    %1939 = vadd.xlane.f32.xlu0 %v1938
    %v1940 = vpop.xlane.xlu0 %1939
    %v1941 = vmul.f32 %v1937, %v843
    %v1942 = vmul.f32 %v1940, %v843
    %v1943 = vadd.f32 %v1941, 1e-05
    %v1944 = vadd.f32 %v1942, 1e-05
    %v1945 = vrsqrt.pop %v1943
    %v1946 = vmul.f32 %v1945, %v1943
    %v1947 = vmul.f32 %v1946, %v1945
    %v1948 = vmul.f32 0.5, %v1947
    %v1949 = vsub.f32 1.5, %v1948
    %v1950 = vmul.f32 %v1945, %v1949
    %vm1951 = vweird.f32 %v1943
    %vm1952 = vweird.f32 %v1945
    %vm1953 = vmor %vm1951, %vm1952
    %v1954 = vsel %vm1953, %v1945, %v1950
    %v1955 = vrsqrt.pop %v1944
    %v1956 = vmul.f32 %v1955, %v1944
    %v1957 = vmul.f32 %v1956, %v1955
    %v1958 = vmul.f32 0.5, %v1957
    %v1959 = vsub.f32 1.5, %v1958
    %v1960 = vmul.f32 %v1955, %v1959
    %vm1961 = vweird.f32 %v1944
    %vm1962 = vweird.f32 %v1955
    %vm1963 = vmor %vm1961, %vm1962
    %v1964 = vsel %vm1963, %v1955, %v1960
    %v1965 = vmul.f32 %v1931, %v1954
    %v1966 = vmul.f32 %v1932, %v1964
    %v1967 = vmul.f32 %v1965, %v1919
    %v1968 = vmul.f32 %v1966, %v1919
    %v1969 = vadd.f32 %v1967, %v1920
    %v1970 = vadd.f32 %v1968, %v1920
    %v1971 = vld [vmem:[%s1 + $0x510] sm:$0xff]
    %v1972 = vld [vmem:[%s1 + $0x520] sm:$0xff]
    %v1973 = vld [vmem:[%s1 + $0x530] sm:$0xff]
    %v1974 = vld [vmem:[%s1 + $0x540] sm:$0xff]
    %v1975 = vld [vmem:[%s1 + $0x550] sm:$0xff]
    %v1976 = vld [vmem:[%s1 + $0x560] sm:$0xff]
    %v1977 = vld [vmem:[%s1 + $0x570] sm:$0xff]
    %v1978 = vld [vmem:[%s1 + $0x580] sm:$0xff]
    %v1979 = vld [vmem:[%s1 + $0x5b1] ss:$0 sm:$0xff]
    %v1982 = vrot.slane %v1969, 7
    %v1983 = vrot.slane %v1970, 6
    %vm1984 = vcmask 1041409
    %v1985 = vsel %vm1984, %v1983, %v1982
    %v1986 = vsel %vm76, %v1985, 0
    %1988 = vmatpush.msra.mxu0 0.0
    %1989 = vmatpush.msra.mxu0 0.0
    %1990 = vmatpush.msra.mxu0 0.0
    %1991 = vmatpush.msra.mxu0 0.0
    %1992 = vmatpush.msra.mxu0 0.0
    %1993 = vmatpush.msra.mxu0 0.0
    %1994 = vmatpush.msra.mxu0 0.0
    %1995 = vmatpush.msra.mxu0 0.0
    %1996 = vmatpush.msra.mxu0 %v1978
    %1997 = vmatpush.msra.mxu0 %v1977
    %1998 = vmatpush.msra.mxu0 %v1976
    %1999 = vmatpush.msra.mxu0 %v1975
    %2000 = vmatpush.msra.mxu0 %v1974
    %2001 = vmatpush.msra.mxu0 %v1973
    %2002 = vmatpush.msra.mxu0 %v1972
    %2003 = vmatpush.msra.mxu0 %v1971
    %2004 = vmatmul.f32.gmra.mxu0 %v1986
    %v2005 = vpop.f32.mrf.mxu0
    %v2006 = vadd.f32 %v1979, %v2005
    %2007 = vdwg.mxu0
    %vm2008 = vcmask 25600
    %2009 = vst.msk [vmem:[#allocation2] sm:$0x3] %vm2008, %v2006
    // Predicated region
    $region10: #{weather_transformer_forward.1} parent=1 // pred_check
      _
    $region11: #{weather_transformer_forward.1} parent=1 // pred_check_branch
      %2011 = sbr.rel (0) target = $region13
    $region12: #{weather_transformer_forward.1} parent=1 // pred_region
      %2013 = vsyncadd [#allocation3], 0
      %s2015 = sshll.u32 [#allocation2], 4
      %s2016 = int_to_ptr.vmem [resolvable:$true] %s2015
      %s2017 = sshll.u32 %s2, 4
      %s2018 = int_to_ptr.hbm [resolvable:$true] %s2017
      %2020 = dma.vmem_to_hbm [thread:$0]  %s2016, 32, %s2018, [#allocation3]
    $region13: #{weather_transformer_forward.1} parent=1 // pred_fallthru
      _
    // Predicated region
    $region14: #{weather_transformer_forward.1} parent=1 // pred_check
      _
    $region15: #{weather_transformer_forward.1} parent=1 // pred_check_branch
      %2022 = sbr.rel (0) target = $region17
    $region16: #{weather_transformer_forward.1} parent=1 // pred_region
      %2024 = dma.done [#allocation3], 32
    $region17: #{weather_transformer_forward.1} parent=1 // pred_fallthru
      _
    %2025 = vsyncpa [#allocation3], 1

</llo_original>
